<compile_context>
chip_gen: v7x
topology: tpu7x:2x2x1
jax: 0.10.0
libtpu: 0.0.40
codegen_flags: <defaults>
</compile_context>

<pallas_src>
import functools

import jax
import jax.numpy as jnp
from jax import lax
from jax.experimental import pallas as pl
from jax.experimental.pallas import tpu as pltpu


def _mha_kernel(x_ref, wqkv_ref, bqkv_ref, wp_ref, bp_ref, o_ref, *,
                n_heads, head_dim, compute_dtype):
    """One batch element per grid step.

    x_ref:    (N, E)     activations (batch dim squeezed by BlockSpec)
    wqkv_ref: (E, 3*E)   fused [Q|K|V] weights; head h occupies lanes h*D:(h+1)*D
    bqkv_ref: (1, 3*E)   fused [Q|K|V] biases (kept f32)
    wp_ref:   (H, D, E)  output projection, split by head along axis 0
    bp_ref:   (1, E)     output projection bias (kept f32)
    o_ref:    (N, E)
    """
    E = n_heads * head_dim
    scale = E ** (-0.5)          # reference scales by n_embd, not head_size

    x = x_ref[...].astype(compute_dtype)

    # Single fused QKV projection: one (N,E)x(E,3E) MXU matmul instead of
    # 3*H tiny (N,E)x(E,D) matmuls.  f32 accumulation, f32 bias add.
    qkv = jnp.dot(x, wqkv_ref[...].astype(compute_dtype),
                  preferred_element_type=jnp.float32) + bqkv_ref[...]

    q = qkv[:, 0 * E:1 * E]          # (N, E) = all heads' q, head-major lanes
    k = qkv[:, 1 * E:2 * E]
    v = qkv[:, 2 * E:3 * E]

    # Per-head attention; output projection accumulated per head
    # (y += out_h @ Wp[h]) so no lane-axis concatenate is needed.
    y = None
    for h in range(n_heads):                               # static unroll (H small)
        lo = h * head_dim
        hi = lo + head_dim
        # Fold the scale into q (N*D elements) instead of the scores (N*N).
        q_h = (q[:, lo:hi] * scale).astype(compute_dtype)  # (N, D)
        k_h = k[:, lo:hi].astype(compute_dtype)            # (N, D)
        v_h = v[:, lo:hi].astype(compute_dtype)            # (N, D)

        # q @ k^T without an explicit transpose: contract the last dims.
        wei = lax.dot_general(q_h, k_h, (((1,), (1,)), ((), ())),
                              preferred_element_type=jnp.float32)     # (N, N)
        # NOTE: the reference's softmax/dropout outputs are never used
        # (out = wei @ v), so they are not emitted (bug kept verbatim).
        out_h = jnp.dot(wei.astype(compute_dtype), v_h,
                        preferred_element_type=jnp.float32)           # (N, D)
        contrib = jnp.dot(out_h.astype(compute_dtype),
                          wp_ref[h].astype(compute_dtype),
                          preferred_element_type=jnp.float32)         # (N, E)
        y = contrib if y is None else y + contrib

    o_ref[...] = (y + bp_ref[...]).astype(o_ref.dtype)


def multi_head_attention(x, wq, bq, wk, bk, wv, bv, wp, bp,
                         *, compute_dtype=jnp.float32):
    """x: (B, N, E); wq/wk/wv: (H, E, D); bq/bk/bv: (H, 1, D); wp: (E, E); bp: (1, E)."""
    B, N, E = x.shape
    H, _, D = wq.shape
    assert H * D == E

    # ---- fuse per-head projections into one (E, 3E) matrix (wrapper-side;
    # in a real model this would be done once at parameter-load time). ------
    def _flatten(w):                              # (H, E, D) -> (E, H*D)
        return jnp.transpose(w, (1, 0, 2)).reshape(E, H * D)

    w_qkv = jnp.concatenate([_flatten(wq), _flatten(wk), _flatten(wv)],
                            axis=1)               # (E, 3E)
    b_qkv = jnp.concatenate([bq.reshape(1, H * D), bk.reshape(1, H * D),
                             bv.reshape(1, H * D)], axis=1)       # (1, 3E), f32
    wp_r = wp.reshape(H, D, E)                    # row-block h multiplies head h
    bp_r = bp.reshape(1, E)                       # f32

    x_in = x
    if compute_dtype == jnp.bfloat16:             # bf16 MXU operands (v6e/v7x)
        x_in = x.astype(jnp.bfloat16)
        w_qkv = w_qkv.astype(jnp.bfloat16)
        wp_r = wp_r.astype(jnp.bfloat16)

    # Advisory cost estimate so XLA schedules this tiny call correctly.
    flops = int(B * (2 * N * E * (3 * E)              # fused QKV
                     + H * (4 * N * N * D             # scores + wei @ v
                            + 2 * N * D * E)))        # per-head output proj
    bytes_accessed = int(
        x_in.size * x_in.dtype.itemsize
        + w_qkv.size * w_qkv.dtype.itemsize
        + b_qkv.size * b_qkv.dtype.itemsize
        + wp_r.size * wp_r.dtype.itemsize
        + bp_r.size * bp_r.dtype.itemsize
        + B * N * E * x.dtype.itemsize)
    cost = pl.CostEstimate(flops=flops, transcendentals=0,
                           bytes_accessed=bytes_accessed)

    kernel = functools.partial(_mha_kernel, n_heads=H, head_dim=D,
                               compute_dtype=compute_dtype)

    # TODO(synk): for large N/E, add a sequence-axis grid dim and tile the
    # (N, N) scores instead of keeping everything whole-block (v7x VMEM).
    return pl.pallas_call(
        kernel,
        out_shape=jax.ShapeDtypeStruct((B, N, E), x.dtype),
        grid=(B,),
        in_specs=[
            pl.BlockSpec((None, N, E), lambda b: (b, 0, 0)),   # x (batch squeezed)
            pl.BlockSpec((E, 3 * E), lambda b: (0, 0)),        # fused W_qkv
            pl.BlockSpec((1, 3 * E), lambda b: (0, 0)),        # fused b_qkv
            pl.BlockSpec((H, D, E), lambda b: (0, 0, 0)),      # Wp reshaped
            pl.BlockSpec((1, E), lambda b: (0, 0)),            # bp
        ],
        out_specs=pl.BlockSpec((None, N, E), lambda b: (b, 0, 0)),
        compiler_params=pltpu.CompilerParams(
            dimension_semantics=("parallel",),                 # batch -> 2nd TC on v7x
            vmem_limit_bytes=32 * 1024 * 1024),
        cost_estimate=cost,
    )(x_in, w_qkv, b_qkv, wp_r, bp_r)


def mha_reference(x, wq, bq, wk, bk, wv, bv, wp, bp):
    """Pure-JAX reference for verification (same buggy semantics as PyTorch)."""
    B, N, E = x.shape
    H, _, D = wq.shape
    scale = E ** (-0.5)
    outs = []
    for h in range(H):
        q = x @ wq[h] + bq[h]
        k = x @ wk[h] + bk[h]
        v = x @ wv[h] + bv[h]
        wei = jnp.einsum("bnd,bmd->bnm", q, k) * scale
        outs.append(jnp.einsum("bnm,bmd->bnd", wei, v))
    cat = jnp.concatenate(outs, axis=-1)
    return cat @ wp + bp[0]


if __name__ == "__main__":
    # Config: n_embd=32, n_heads=4 -> head_size=8 ; batch=2, seq=8
    B, N, E, H = 2, 8, 32, 4
    D = E // H

    key = jax.random.PRNGKey(0)
    ks = jax.random.split(key, 9)
    std = 0.02
    x  = jax.random.normal(ks[0], (B, N, E), dtype=jnp.float32)
    wq = jax.random.normal(ks[1], (H, E, D), dtype=jnp.float32) * std
    bq = jax.random.normal(ks[2], (H, 1, D), dtype=jnp.float32) * std
    wk = jax.random.normal(ks[3], (H, E, D), dtype=jnp.float32) * std
    bk = jax.random.normal(ks[4], (H, 1, D), dtype=jnp.float32) * std
    wv = jax.random.normal(ks[5], (H, E, D), dtype=jnp.float32) * std
    bv = jax.random.normal(ks[6], (H, 1, D), dtype=jnp.float32) * std
    wp = jax.random.normal(ks[7], (E, E), dtype=jnp.float32) * std
    bp = jax.random.normal(ks[8], (1, E), dtype=jnp.float32) * std

    ref = mha_reference(x, wq, bq, wk, bk, wv, bv, wp, bp)

    # f32 compute path (v5e / strict-numerics): tight tolerance.
    out = multi_head_attention(x, wq, bq, wk, bk, wv, bv, wp, bp)
    out = jax.block_until_ready(out)
    assert out.shape == (B, N, E)
    assert jnp.allclose(out, ref, atol=1e-5, rtol=1e-5), "f32 mismatch vs reference"

    # bf16-operand path (v6e / v7x MXU): f32 accumulation, looser tolerance.
    out_bf16 = multi_head_attention(x, wq, bq, wk, bk, wv, bv, wp, bp,
                                    compute_dtype=jnp.bfloat16)
    out_bf16 = jax.block_until_ready(out_bf16)
    assert jnp.allclose(out_bf16, ref, atol=2e-3, rtol=2e-2), "bf16 mismatch vs reference"

    print("KERNEL_OK")
</pallas_src>

<mosaic_0001>
module attributes {stable_mosaic.version = 11 : i64} {
  func.func @_mha_kernel(%arg0: i32, %arg1: memref<1x8x32xf32, #tpu.memory_space<vmem>>, %arg2: memref<32x96xf32, #tpu.memory_space<vmem>>, %arg3: memref<1x96xf32, #tpu.memory_space<vmem>>, %arg4: memref<4x8x32xf32, #tpu.memory_space<vmem>>, %arg5: memref<1x32xf32, #tpu.memory_space<vmem>>, %arg6: memref<1x8x32xf32, #tpu.memory_space<vmem>>) attributes {dimension_semantics = [#tpu.dimension_semantics<parallel>], iteration_bounds = array<i64: 2>, scalar_prefetch = 0 : i64, scratch_operands = 0 : i64, tpu.core_type = #tpu.core_type<tc>, window_params = [{transform_indices = @transform_0, window_bounds = array<i64: 1, 8, 32>}, {pipeline_mode = #tpu.pipeline_mode<synchronous>, transform_indices = @transform_1, window_bounds = array<i64: 32, 96>}, {pipeline_mode = #tpu.pipeline_mode<synchronous>, transform_indices = @transform_2, window_bounds = array<i64: 1, 96>}, {pipeline_mode = #tpu.pipeline_mode<synchronous>, transform_indices = @transform_3, window_bounds = array<i64: 4, 8, 32>}, {pipeline_mode = #tpu.pipeline_mode<synchronous>, transform_indices = @transform_4, window_bounds = array<i64: 1, 32>}, {transform_indices = @transform_5, window_bounds = array<i64: 1, 8, 32>}]} {
    %c0 = arith.constant 0 : index
    %c0_0 = arith.constant 0 : index
    %c0_1 = arith.constant 0 : index
    %0 = vector.load %arg1[%c0, %c0_0, %c0_1] : memref<1x8x32xf32, #tpu.memory_space<vmem>>, vector<1x8x32xf32>
    %1 = vector.shape_cast %0 : vector<1x8x32xf32> to vector<8x32xf32>
    %c0_2 = arith.constant 0 : index
    %c0_3 = arith.constant 0 : index
    %2 = vector.load %arg2[%c0_2, %c0_3] : memref<32x96xf32, #tpu.memory_space<vmem>>, vector<32x96xf32>
    %cst = arith.constant dense<0.000000e+00> : vector<8x96xf32>
    %3 = tpu.matmul %1, %2, %cst {dimension_numbers = #tpu.dot_dimension_numbers<[1], [0], [0], [1], [0, 0, 1, 1], [], []>} : vector<8x32xf32>, vector<32x96xf32>, vector<8x96xf32> -> vector<8x96xf32>
    %c0_4 = arith.constant 0 : index
    %c0_5 = arith.constant 0 : index
    %4 = vector.load %arg3[%c0_4, %c0_5] : memref<1x96xf32, #tpu.memory_space<vmem>>, vector<1x96xf32>
    %5 = vector.broadcast %4 : vector<1x96xf32> to vector<8x96xf32>
    %6 = arith.addf %3, %5 : vector<8x96xf32>
    %7 = vector.extract_strided_slice %6 {offsets = [0, 0], sizes = [8, 32], strides = [1, 1]} : vector<8x96xf32> to vector<8x32xf32>
    %8 = vector.extract_strided_slice %6 {offsets = [0, 32], sizes = [8, 32], strides = [1, 1]} : vector<8x96xf32> to vector<8x32xf32>
    %9 = vector.extract_strided_slice %6 {offsets = [0, 64], sizes = [8, 32], strides = [1, 1]} : vector<8x96xf32> to vector<8x32xf32>
    %10 = vector.extract_strided_slice %7 {offsets = [0, 0], sizes = [8, 8], strides = [1, 1]} : vector<8x32xf32> to vector<8x8xf32>
    %cst_6 = arith.constant 0.176776692 : f32
    %11 = vector.broadcast %cst_6 : f32 to vector<8x8xf32>
    %12 = arith.mulf %10, %11 : vector<8x8xf32>
    %13 = vector.extract_strided_slice %8 {offsets = [0, 0], sizes = [8, 8], strides = [1, 1]} : vector<8x32xf32> to vector<8x8xf32>
    %14 = vector.extract_strided_slice %9 {offsets = [0, 0], sizes = [8, 8], strides = [1, 1]} : vector<8x32xf32> to vector<8x8xf32>
    %cst_7 = arith.constant dense<0.000000e+00> : vector<8x8xf32>
    %15 = tpu.matmul %12, %13, %cst_7 {dimension_numbers = #tpu.dot_dimension_numbers<[1], [1], [0], [0], [0, 0, 1, 0], [], []>} : vector<8x8xf32>, vector<8x8xf32>, vector<8x8xf32> -> vector<8x8xf32>
    %cst_8 = arith.constant dense<0.000000e+00> : vector<8x8xf32>
    %16 = tpu.matmul %15, %14, %cst_8 {dimension_numbers = #tpu.dot_dimension_numbers<[1], [0], [0], [1], [0, 0, 1, 1], [], []>} : vector<8x8xf32>, vector<8x8xf32>, vector<8x8xf32> -> vector<8x8xf32>
    %c0_9 = arith.constant 0 : index
    %c0_10 = arith.constant 0 : index
    %c0_11 = arith.constant 0 : index
    %17 = vector.load %arg4[%c0_9, %c0_10, %c0_11] : memref<4x8x32xf32, #tpu.memory_space<vmem>>, vector<1x8x32xf32>
    %18 = vector.shape_cast %17 : vector<1x8x32xf32> to vector<8x32xf32>
    %cst_12 = arith.constant dense<0.000000e+00> : vector<8x32xf32>
    %19 = tpu.matmul %16, %18, %cst_12 {dimension_numbers = #tpu.dot_dimension_numbers<[1], [0], [0], [1], [0, 0, 1, 1], [], []>} : vector<8x8xf32>, vector<8x32xf32>, vector<8x32xf32> -> vector<8x32xf32>
    %20 = vector.extract_strided_slice %7 {offsets = [0, 8], sizes = [8, 8], strides = [1, 1]} : vector<8x32xf32> to vector<8x8xf32>
    %cst_13 = arith.constant 0.176776692 : f32
    %21 = vector.broadcast %cst_13 : f32 to vector<8x8xf32>
    %22 = arith.mulf %20, %21 : vector<8x8xf32>
    %23 = vector.extract_strided_slice %8 {offsets = [0, 8], sizes = [8, 8], strides = [1, 1]} : vector<8x32xf32> to vector<8x8xf32>
    %24 = vector.extract_strided_slice %9 {offsets = [0, 8], sizes = [8, 8], strides = [1, 1]} : vector<8x32xf32> to vector<8x8xf32>
    %cst_14 = arith.constant dense<0.000000e+00> : vector<8x8xf32>
    %25 = tpu.matmul %22, %23, %cst_14 {dimension_numbers = #tpu.dot_dimension_numbers<[1], [1], [0], [0], [0, 0, 1, 0], [], []>} : vector<8x8xf32>, vector<8x8xf32>, vector<8x8xf32> -> vector<8x8xf32>
    %cst_15 = arith.constant dense<0.000000e+00> : vector<8x8xf32>
    %26 = tpu.matmul %25, %24, %cst_15 {dimension_numbers = #tpu.dot_dimension_numbers<[1], [0], [0], [1], [0, 0, 1, 1], [], []>} : vector<8x8xf32>, vector<8x8xf32>, vector<8x8xf32> -> vector<8x8xf32>
    %c1 = arith.constant 1 : index
    %c0_16 = arith.constant 0 : index
    %c0_17 = arith.constant 0 : index
    %27 = vector.load %arg4[%c1, %c0_16, %c0_17] : memref<4x8x32xf32, #tpu.memory_space<vmem>>, vector<1x8x32xf32>
    %28 = vector.shape_cast %27 : vector<1x8x32xf32> to vector<8x32xf32>
    %cst_18 = arith.constant dense<0.000000e+00> : vector<8x32xf32>
    %29 = tpu.matmul %26, %28, %cst_18 {dimension_numbers = #tpu.dot_dimension_numbers<[1], [0], [0], [1], [0, 0, 1, 1], [], []>} : vector<8x8xf32>, vector<8x32xf32>, vector<8x32xf32> -> vector<8x32xf32>
    %30 = arith.addf %19, %29 : vector<8x32xf32>
    %31 = vector.extract_strided_slice %7 {offsets = [0, 16], sizes = [8, 8], strides = [1, 1]} : vector<8x32xf32> to vector<8x8xf32>
    %cst_19 = arith.constant 0.176776692 : f32
    %32 = vector.broadcast %cst_19 : f32 to vector<8x8xf32>
    %33 = arith.mulf %31, %32 : vector<8x8xf32>
    %34 = vector.extract_strided_slice %8 {offsets = [0, 16], sizes = [8, 8], strides = [1, 1]} : vector<8x32xf32> to vector<8x8xf32>
    %35 = vector.extract_strided_slice %9 {offsets = [0, 16], sizes = [8, 8], strides = [1, 1]} : vector<8x32xf32> to vector<8x8xf32>
    %cst_20 = arith.constant dense<0.000000e+00> : vector<8x8xf32>
    %36 = tpu.matmul %33, %34, %cst_20 {dimension_numbers = #tpu.dot_dimension_numbers<[1], [1], [0], [0], [0, 0, 1, 0], [], []>} : vector<8x8xf32>, vector<8x8xf32>, vector<8x8xf32> -> vector<8x8xf32>
    %cst_21 = arith.constant dense<0.000000e+00> : vector<8x8xf32>
    %37 = tpu.matmul %36, %35, %cst_21 {dimension_numbers = #tpu.dot_dimension_numbers<[1], [0], [0], [1], [0, 0, 1, 1], [], []>} : vector<8x8xf32>, vector<8x8xf32>, vector<8x8xf32> -> vector<8x8xf32>
    %c2 = arith.constant 2 : index
    %c0_22 = arith.constant 0 : index
    %c0_23 = arith.constant 0 : index
    %38 = vector.load %arg4[%c2, %c0_22, %c0_23] : memref<4x8x32xf32, #tpu.memory_space<vmem>>, vector<1x8x32xf32>
    %39 = vector.shape_cast %38 : vector<1x8x32xf32> to vector<8x32xf32>
    %cst_24 = arith.constant dense<0.000000e+00> : vector<8x32xf32>
    %40 = tpu.matmul %37, %39, %cst_24 {dimension_numbers = #tpu.dot_dimension_numbers<[1], [0], [0], [1], [0, 0, 1, 1], [], []>} : vector<8x8xf32>, vector<8x32xf32>, vector<8x32xf32> -> vector<8x32xf32>
    %41 = arith.addf %30, %40 : vector<8x32xf32>
    %42 = vector.extract_strided_slice %7 {offsets = [0, 24], sizes = [8, 8], strides = [1, 1]} : vector<8x32xf32> to vector<8x8xf32>
    %cst_25 = arith.constant 0.176776692 : f32
    %43 = vector.broadcast %cst_25 : f32 to vector<8x8xf32>
    %44 = arith.mulf %42, %43 : vector<8x8xf32>
    %45 = vector.extract_strided_slice %8 {offsets = [0, 24], sizes = [8, 8], strides = [1, 1]} : vector<8x32xf32> to vector<8x8xf32>
    %46 = vector.extract_strided_slice %9 {offsets = [0, 24], sizes = [8, 8], strides = [1, 1]} : vector<8x32xf32> to vector<8x8xf32>
    %cst_26 = arith.constant dense<0.000000e+00> : vector<8x8xf32>
    %47 = tpu.matmul %44, %45, %cst_26 {dimension_numbers = #tpu.dot_dimension_numbers<[1], [1], [0], [0], [0, 0, 1, 0], [], []>} : vector<8x8xf32>, vector<8x8xf32>, vector<8x8xf32> -> vector<8x8xf32>
    %cst_27 = arith.constant dense<0.000000e+00> : vector<8x8xf32>
    %48 = tpu.matmul %47, %46, %cst_27 {dimension_numbers = #tpu.dot_dimension_numbers<[1], [0], [0], [1], [0, 0, 1, 1], [], []>} : vector<8x8xf32>, vector<8x8xf32>, vector<8x8xf32> -> vector<8x8xf32>
    %c3 = arith.constant 3 : index
    %c0_28 = arith.constant 0 : index
    %c0_29 = arith.constant 0 : index
    %49 = vector.load %arg4[%c3, %c0_28, %c0_29] : memref<4x8x32xf32, #tpu.memory_space<vmem>>, vector<1x8x32xf32>
    %50 = vector.shape_cast %49 : vector<1x8x32xf32> to vector<8x32xf32>
    %cst_30 = arith.constant dense<0.000000e+00> : vector<8x32xf32>
    %51 = tpu.matmul %48, %50, %cst_30 {dimension_numbers = #tpu.dot_dimension_numbers<[1], [0], [0], [1], [0, 0, 1, 1], [], []>} : vector<8x8xf32>, vector<8x32xf32>, vector<8x32xf32> -> vector<8x32xf32>
    %52 = arith.addf %41, %51 : vector<8x32xf32>
    %c0_31 = arith.constant 0 : index
    %c0_32 = arith.constant 0 : index
    %53 = vector.load %arg5[%c0_31, %c0_32] : memref<1x32xf32, #tpu.memory_space<vmem>>, vector<1x32xf32>
    %54 = vector.broadcast %53 : vector<1x32xf32> to vector<8x32xf32>
    %55 = arith.addf %52, %54 : vector<8x32xf32>
    %c0_33 = arith.constant 0 : index
    %c0_34 = arith.constant 0 : index
    %c0_35 = arith.constant 0 : index
    %56 = vector.load %arg6[%c0_33, %c0_34, %c0_35] : memref<1x8x32xf32, #tpu.memory_space<vmem>>, vector<1x8x32xf32>
    %57 = vector.shape_cast %56 : vector<1x8x32xf32> to vector<8x32xf32>
    %58 = vector.shape_cast %55 : vector<8x32xf32> to vector<1x8x32xf32>
    tpu.vector_store %arg6[%c0_33, %c0_34, %c0_35], %58 {strides = array<i32>} : memref<1x8x32xf32, #tpu.memory_space<vmem>>, vector<1x8x32xf32>,
    return
  }
  func.func @transform_0(%arg0: i32) -> (i32, i32, i32) {
    %c0_i32 = arith.constant 0 : i32
    %c0_i32_0 = arith.constant 0 : i32
    %c0_i32_1 = arith.constant 0 : i32
    return %arg0, %c0_i32, %c0_i32_0 : i32, i32, i32
  }
  func.func @transform_1(%arg0: i32) -> (i32, i32) {
    %c0_i32 = arith.constant 0 : i32
    %c0_i32_0 = arith.constant 0 : i32
    %c0_i32_1 = arith.constant 0 : i32
    return %c0_i32, %c0_i32_0 : i32, i32
  }
  func.func @transform_2(%arg0: i32) -> (i32, i32) {
    %c0_i32 = arith.constant 0 : i32
    %c0_i32_0 = arith.constant 0 : i32
    %c0_i32_1 = arith.constant 0 : i32
    return %c0_i32, %c0_i32_0 : i32, i32
  }
  func.func @transform_3(%arg0: i32) -> (i32, i32, i32) {
    %c0_i32 = arith.constant 0 : i32
    %c0_i32_0 = arith.constant 0 : i32
    %c0_i32_1 = arith.constant 0 : i32
    %c0_i32_2 = arith.constant 0 : i32
    return %c0_i32, %c0_i32_0, %c0_i32_1 : i32, i32, i32
  }
  func.func @transform_4(%arg0: i32) -> (i32, i32) {
    %c0_i32 = arith.constant 0 : i32
    %c0_i32_0 = arith.constant 0 : i32
    %c0_i32_1 = arith.constant 0 : i32
    return %c0_i32, %c0_i32_0 : i32, i32
  }
  func.func @transform_5(%arg0: i32) -> (i32, i32, i32) {
    %c0_i32 = arith.constant 0 : i32
    %c0_i32_0 = arith.constant 0 : i32
    %c0_i32_1 = arith.constant 0 : i32
    return %arg0, %c0_i32, %c0_i32_0 : i32, i32, i32
  }
}

</mosaic_0001>

<llo_original>
// kernel: tpu_custom_call.1
$region0: #{tpu_custom_call.1}
  #allocation0 [shape = 'u32[]', space=smem, size = 0x4, offset = 0x4, fixed_abs, tag = 'smem constant byte address 0x4 - core index']
  #allocation1 [shape = 'u32[144,128]{1,0:T(1,128)}', space=vmem, size = 0x12000, scoped, tag = 'internal scratch']
  %s0 = inlined_call_operand.hbm [shape: f32[2,8,32], index: 0, kind: input, shape index: {}]
  %s1 = inlined_call_operand.hbm [shape: f32[32,96], index: 1, kind: input, shape index: {}]
  %s2 = inlined_call_operand.vmem [shape: f32[1,96], index: 2, kind: input, shape index: {}]
  %s3 = inlined_call_operand.hbm [shape: f32[4,8,32], index: 3, kind: input, shape index: {}]
  %s4 = inlined_call_operand.vmem [shape: f32[1,32], index: 4, kind: input, shape index: {}]
  %s5 = inlined_call_operand.hbm [shape: f32[2,8,32], index: 5, kind: output, shape index: {}]
  %s6 = sld [smem:[#allocation0]]
  $region65: #{tpu_custom_call.1} parent=0
    _
  %s8 = ssub.s32 1, %s6
  %s9 = scalar_select 0, %s8, %s6
  $region1: #{tpu_custom_call.1} parent=0
    #allocation2 [shape = 'u8[8192]{0}', space=vmem, size = 0x2000, scoped, tag = 'input window, operand 0']
    #allocation3 [shape = 's32[2]{0}', space=sflag, size = 0x8, scoped, tag = 'scoped memory for tpu_custom_call.1']
    #allocation4 [shape = 's32[2]{0}', space=sflag, size = 0x8, scoped, tag = 'scoped memory for tpu_custom_call.1']
    #allocation5 [shape = 'u8[16384]{0}', space=vmem, size = 0x4000, scoped, tag = 'input window, operand 1, single buffered']
    #allocation6 [shape = 's32[1]{0}', space=sflag, size = 0x4, scoped, tag = 'scoped memory for tpu_custom_call.1']
    #allocation7 [shape = 'u8[16384]{0}', space=vmem, size = 0x4000, scoped, tag = 'input window, operand 3, single buffered']
    #allocation8 [shape = 'u8[8192]{0}', space=vmem, size = 0x2000, scoped, tag = 'output window, operand 0']
    %10 = vsyncpa [#allocation3], 0
    %s11 = scalar_lea.sflag [#allocation3], 1
    %12 = vsyncpa %s11, 0
    %13 = vsyncpa [#allocation6], 0
    %14 = vsyncpa [#allocation4], 0
    %s15 = scalar_lea.sflag [#allocation4], 1
    %16 = vsyncpa %s15, 0
    loop: start=0, step=1, limit=4
    $region2: #{tpu_custom_call.1} parent=1 // loop_pre_header
      _
    $region3: #{tpu_custom_call.1} parent=1 // loop_header
      %s18 = sphi 0, %s22
      %p19 = scmp.ge.s32.totalorder %s18, 4
      %s28 = sphi 0, %s30
      %s31 = sphi 0, %s28
      %s32 = sphi 0, %s31
      %s48 = sphi 0, %s32
      %s52 = sphi 0, %s52
      %s54 = sphi 0, %s52
      %s55 = sphi 0, %s54
      %s69 = sphi 0, %s55
      %s73 = sphi 0, %s73
      %s75 = sphi 0, %s73
      %s76 = sphi 0, %s75
      %s90 = sphi 0, %s76
      %s94 = sphi 0, %s94
      %s96 = sphi 0, %s94
      %s97 = sphi 0, %s96
      %s111 = sphi 0, %s97
      %s115 = sphi 0, %s115
      %s117 = sphi 0, %s115
      %s118 = sphi 0, %s117
      %s132 = sphi 0, %s118
      %s138 = sphi 0, %s140
      %s141 = sphi 0, %s138
      %s142 = sphi 0, %s141
      %s158 = sphi 0, %s142
    $region4: #{tpu_custom_call.1} parent=1 // loop_header_branch
      %21 = sbr.rel (%p19) target = $region8
    $region5: #{tpu_custom_call.1} parent=1 // loop_body
      %s23 = ssub.s32 %s18, 1
      %s24 = ssub.s32 %s18, 2
      %s25 = sadd.s32 %s18, 1
      %s26 = ssub.s32 %s18, %s25
      %p27 = scmp.eq.s32.totalorder %s26, 0
      %s29 = sadd.s32 %s28, 1
      %s30 = scalar_select %p27, %s28, %s29
      %p33 = pneg %p27
      %p34 = scmp.eq.s32.totalorder %s18, 1
      %p35 = por %p33, %p34
      %p36 = scmp.ne.s32.totalorder %s28, %s31
      %p37 = scmp.eq.s32.totalorder %s18, 0
      %p38 = por %p36, %p37
      %p39 = scmp.ne.s32.totalorder %s28, %s31
      %p40 = scmp.eq.s32.totalorder %s23, 1
      %p41 = por %p39, %p40
      %p42 = scmp.ne.s32.totalorder %s31, %s32
      %p43 = scmp.eq.s32.totalorder %s23, 0
      %p44 = por %p42, %p43
      %p45 = scmp.ne.s32.totalorder %s31, %s32
      %p46 = scmp.eq.s32.totalorder %s24, 1
      %p47 = por %p45, %p46
      %p49 = scmp.ne.s32.totalorder %s32, %s48
      %p50 = scmp.eq.s32.totalorder %s24, 0
      %p51 = por %p49, %p50
      %s53 = sadd.s32 %s52, 1
      %p56 = scmp.eq.s32.totalorder %s18, 1
      %p57 = scmp.ne.s32.totalorder %s52, %s54
      %p58 = scmp.eq.s32.totalorder %s18, 0
      %p59 = por %p57, %p58
      %p60 = scmp.ne.s32.totalorder %s52, %s54
      %p61 = scmp.eq.s32.totalorder %s23, 1
      %p62 = por %p60, %p61
      %p63 = scmp.ne.s32.totalorder %s54, %s55
      %p64 = scmp.eq.s32.totalorder %s23, 0
      %p65 = por %p63, %p64
      %p66 = scmp.ne.s32.totalorder %s54, %s55
      %p67 = scmp.eq.s32.totalorder %s24, 1
      %p68 = por %p66, %p67
      %p70 = scmp.ne.s32.totalorder %s55, %s69
      %p71 = scmp.eq.s32.totalorder %s24, 0
      %p72 = por %p70, %p71
      %s74 = sadd.s32 %s73, 1
      %p77 = scmp.eq.s32.totalorder %s18, 1
      %p78 = scmp.ne.s32.totalorder %s73, %s75
      %p79 = scmp.eq.s32.totalorder %s18, 0
      %p80 = por %p78, %p79
      %p81 = scmp.ne.s32.totalorder %s73, %s75
      %p82 = scmp.eq.s32.totalorder %s23, 1
      %p83 = por %p81, %p82
      %p84 = scmp.ne.s32.totalorder %s75, %s76
      %p85 = scmp.eq.s32.totalorder %s23, 0
      %p86 = por %p84, %p85
      %p87 = scmp.ne.s32.totalorder %s75, %s76
      %p88 = scmp.eq.s32.totalorder %s24, 1
      %p89 = por %p87, %p88
      %p91 = scmp.ne.s32.totalorder %s76, %s90
      %p92 = scmp.eq.s32.totalorder %s24, 0
      %p93 = por %p91, %p92
      %s95 = sadd.s32 %s94, 1
      %p98 = scmp.eq.s32.totalorder %s18, 1
      %p99 = scmp.ne.s32.totalorder %s94, %s96
      %p100 = scmp.eq.s32.totalorder %s18, 0
      %p101 = por %p99, %p100
      %p102 = scmp.ne.s32.totalorder %s94, %s96
      %p103 = scmp.eq.s32.totalorder %s23, 1
      %p104 = por %p102, %p103
      %p105 = scmp.ne.s32.totalorder %s96, %s97
      %p106 = scmp.eq.s32.totalorder %s23, 0
      %p107 = por %p105, %p106
      %p108 = scmp.ne.s32.totalorder %s96, %s97
      %p109 = scmp.eq.s32.totalorder %s24, 1
      %p110 = por %p108, %p109
      %p112 = scmp.ne.s32.totalorder %s97, %s111
      %p113 = scmp.eq.s32.totalorder %s24, 0
      %p114 = por %p112, %p113
      %s116 = sadd.s32 %s115, 1
      %p119 = scmp.eq.s32.totalorder %s18, 1
      %p120 = scmp.ne.s32.totalorder %s115, %s117
      %p121 = scmp.eq.s32.totalorder %s18, 0
      %p122 = por %p120, %p121
      %p123 = scmp.ne.s32.totalorder %s115, %s117
      %p124 = scmp.eq.s32.totalorder %s23, 1
      %p125 = por %p123, %p124
      %p126 = scmp.ne.s32.totalorder %s117, %s118
      %p127 = scmp.eq.s32.totalorder %s23, 0
      %p128 = por %p126, %p127
      %p129 = scmp.ne.s32.totalorder %s117, %s118
      %p130 = scmp.eq.s32.totalorder %s24, 1
      %p131 = por %p129, %p130
      %p133 = scmp.ne.s32.totalorder %s118, %s132
      %p134 = scmp.eq.s32.totalorder %s24, 0
      %p135 = por %p133, %p134
      %s136 = ssub.s32 %s18, %s25
      %p137 = scmp.eq.s32.totalorder %s136, 0
      %s139 = sadd.s32 %s138, 1
      %s140 = scalar_select %p137, %s138, %s139
      %p143 = pneg %p137
      %p144 = scmp.eq.s32.totalorder %s18, 1
      %p145 = por %p143, %p144
      %p146 = scmp.ne.s32.totalorder %s138, %s141
      %p147 = scmp.eq.s32.totalorder %s18, 0
      %p148 = por %p146, %p147
      %p149 = scmp.ne.s32.totalorder %s138, %s141
      %p150 = scmp.eq.s32.totalorder %s23, 1
      %p151 = por %p149, %p150
      %p152 = scmp.ne.s32.totalorder %s141, %s142
      %p153 = scmp.eq.s32.totalorder %s23, 0
      %p154 = por %p152, %p153
      %p155 = scmp.ne.s32.totalorder %s141, %s142
      %p156 = scmp.eq.s32.totalorder %s24, 1
      %p157 = por %p155, %p156
      %p159 = scmp.ne.s32.totalorder %s142, %s158
      %p160 = scmp.eq.s32.totalorder %s24, 0
      %p161 = por %p159, %p160
      %p162 = scmp.le.s32.totalorder 1, %s18
      %p163 = scmp.lt.s32.totalorder %s18, 3
      %p164 = pnand %p162, %p163
      %p165 = pneg %p164
      // Predicated region
      $region9: #{tpu_custom_call.1} parent=5 // pred_check
        _
      $region10: #{tpu_custom_call.1} parent=5 // pred_check_branch
        %167 = sbr.rel (%p164) target = $region12
      $region11: #{tpu_custom_call.1} parent=5 // pred_region
        %s168 = ssub.s32 %s18, 1
        // Predicated region
        $region13: #{tpu_custom_call.1} parent=11 // pred_check
          %p169 = pneg %p65
        $region14: #{tpu_custom_call.1} parent=11 // pred_check_branch
          %171 = sbr.rel (%p169) target = $region16
        $region15: #{tpu_custom_call.1} parent=11 // pred_region
          %s173 = ssub.s32 512, 512
          %174 = vsyncadd [#allocation6], %s173
          %s175 = sshll.u32 [#allocation5], 4
          %s176 = int_to_ptr.vmem [resolvable:$true] %s175
          %181 = dma.hbm_to_vmem [thread:$0]  %s1, 512, %s176, [#allocation6], 128, 128, 8
        $region16: #{tpu_custom_call.1} parent=11 // pred_fallthru
          _
        // Predicated region
        $region17: #{tpu_custom_call.1} parent=11 // pred_check
          %p182 = pneg %p86
        $region18: #{tpu_custom_call.1} parent=11 // pred_check_branch
          %184 = sbr.rel (%p182) target = $region20
        $region19: #{tpu_custom_call.1} parent=11 // pred_region
          _
        $region20: #{tpu_custom_call.1} parent=11 // pred_fallthru
          _
        // Predicated region
        $region21: #{tpu_custom_call.1} parent=11 // pred_check
          %p185 = pneg %p107
        $region22: #{tpu_custom_call.1} parent=11 // pred_check_branch
          %187 = sbr.rel (%p185) target = $region24
        $region23: #{tpu_custom_call.1} parent=11 // pred_region
          %s189 = ssub.s32 512, 512
          %190 = vsyncadd [#allocation6], %s189
          %s191 = sshll.u32 [#allocation7], 4
          %s192 = int_to_ptr.vmem [resolvable:$true] %s191
          %197 = dma.hbm_to_vmem [thread:$0]  %s3, 512, %s192, [#allocation6], 128, 128, 8
        $region24: #{tpu_custom_call.1} parent=11 // pred_fallthru
          _
        // Predicated region
        $region25: #{tpu_custom_call.1} parent=11 // pred_check
          %p198 = pneg %p128
        $region26: #{tpu_custom_call.1} parent=11 // pred_check_branch
          %200 = sbr.rel (%p198) target = $region28
        $region27: #{tpu_custom_call.1} parent=11 // pred_region
          _
        $region28: #{tpu_custom_call.1} parent=11 // pred_fallthru
          _
      $region12: #{tpu_custom_call.1} parent=5 // pred_fallthru
        _
      %p201 = scmp.lt.s32.totalorder %s18, 2
      // Predicated region
      $region29: #{tpu_custom_call.1} parent=5 // pred_check
        %p202 = pneg %p201
      $region30: #{tpu_custom_call.1} parent=5 // pred_check_branch
        %204 = sbr.rel (%p202) target = $region32
      $region31: #{tpu_custom_call.1} parent=5 // pred_region
        // Predicated region
        $region33: #{tpu_custom_call.1} parent=31 // pred_check
          %p205 = pneg %p38
        $region34: #{tpu_custom_call.1} parent=31 // pred_check_branch
          %207 = sbr.rel (%p205) target = $region36
        $region35: #{tpu_custom_call.1} parent=31 // pred_region
          %s208 = sand.u32 %s28, 1
          %s209 = scalar_lea.sflag [#allocation3], %s208
          %s210 = sand.u32 %s28, 1
          %s211 = smul.addr %s210, 8
          %s212 = scalar_lea.vmem [#allocation2], %s211
          %s214 = ssub.s32 128, 128
          %215 = vsyncadd %s209, %s214
          %s216 = smul.addr %s18, 128
          %s217 = scalar_lea.hbm %s0, %s216
          %s219 = sshll.u32 %s212, 4
          %s220 = int_to_ptr.vmem [resolvable:$true] %s219
          %222 = dma.hbm_to_vmem [thread:$0]  %s217, 128, %s220, %s209
        $region36: #{tpu_custom_call.1} parent=31 // pred_fallthru
          _
      $region32: #{tpu_custom_call.1} parent=5 // pred_fallthru
        _
      %p223 = scmp.le.s32.totalorder 1, %s18
      %p224 = scmp.lt.s32.totalorder %s18, 3
      %p225 = pnand %p223, %p224
      %p226 = pneg %p225
      // Predicated region
      $region37: #{tpu_custom_call.1} parent=5 // pred_check
        _
      $region38: #{tpu_custom_call.1} parent=5 // pred_check_branch
        %228 = sbr.rel (%p225) target = $region40
      $region39: #{tpu_custom_call.1} parent=5 // pred_region
        %s229 = ssub.s32 %s18, 1
        %s230 = sand.u32 %s31, 1
        %s231 = scalar_lea.sflag [#allocation3], %s230
        %s232 = sand.u32 %s31, 1
        %s233 = smul.addr %s232, 8
        %s234 = scalar_lea.vmem [#allocation2], %s233
        // Predicated region
        $region41: #{tpu_custom_call.1} parent=39 // pred_check
          %p235 = pneg %p44
        $region42: #{tpu_custom_call.1} parent=39 // pred_check_branch
          %237 = sbr.rel (%p235) target = $region44
        $region43: #{tpu_custom_call.1} parent=39 // pred_region
          %238 = dma.done %s231, 128
        $region44: #{tpu_custom_call.1} parent=39 // pred_fallthru
          _
        // Predicated region
        $region45: #{tpu_custom_call.1} parent=39 // pred_check
          %p239 = pneg %p65
        $region46: #{tpu_custom_call.1} parent=39 // pred_check_branch
          %241 = sbr.rel (%p239) target = $region48
        $region47: #{tpu_custom_call.1} parent=39 // pred_region
          %242 = dma.done [#allocation6], 512
        $region48: #{tpu_custom_call.1} parent=39 // pred_fallthru
          _
        // Predicated region
        $region49: #{tpu_custom_call.1} parent=39 // pred_check
          %p243 = pneg %p107
        $region50: #{tpu_custom_call.1} parent=39 // pred_check_branch
          %245 = sbr.rel (%p243) target = $region52
        $region51: #{tpu_custom_call.1} parent=39 // pred_region
          %246 = dma.done [#allocation6], 512
        $region52: #{tpu_custom_call.1} parent=39 // pred_fallthru
          _
        %s247 = sand.u32 %s31, 1
        %s248 = scalar_lea.sflag [#allocation3], %s247
        %s249 = sand.u32 %s31, 1
        %s250 = smul.addr %s249, 8
        %s251 = scalar_lea.vmem [#allocation2], %s250
        %p252 = pneg %p44
        %p253 = pneg %p41
        %p254 = pneg %p65
        %p255 = pneg %p62
        %p256 = pneg %p86
        %p257 = pneg %p83
        %p258 = pneg %p107
        %p259 = pneg %p104
        %p260 = pneg %p128
        %p261 = pneg %p125
        %p262 = pneg %p154
        %p263 = pneg %p151
        %s264 = sand.u32 %s141, 1
        %s265 = scalar_lea.sflag [#allocation4], %s264
        %s266 = sand.u32 %s141, 1
        %s267 = smul.addr %s266, 8
        %s268 = scalar_lea.vmem [#allocation8], %s267
        %v269 = vld [vmem:[%s234] sm:$0xff]
        %v270 = vld [vmem:[#allocation5] sm:$0xff]
        %v271 = vld [vmem:[#allocation5 + $0x8] sm:$0xff]
        %v272 = vld [vmem:[#allocation5 + $0x10] sm:$0xff]
        %v273 = vld [vmem:[#allocation5 + $0x18] sm:$0xff]
        %v274 = vld [vmem:[%s2] sm:$0x1]
        %v276 = vlaneseq
        %v277 = vshrl.u32 %v276, 7
        %v278 = vsub.s32 0, %v277
        %v279 = vrot.slane %v274, %v278
        %vm281 = vcmask 261120
        %v283 = vsel %vm281, %v269, 0
        %285 = vmatprep.subr.mxu0 0.0
        %286 = vmatpush1.msra.mxu0 %v270
        %287 = vmatprep.subr.mxu0 0.0
        %288 = vmatpush1.msra.mxu0 %v271
        %289 = vmatprep.subr.mxu0 0.0
        %290 = vmatpush1.msra.mxu0 %v272
        %291 = vmatprep.subr.mxu0 0.0
        %292 = vmatpush1.msra.mxu0 %v273
        %293 = vmatprep.subr.mxu0 0.0
        %294 = vmatpush1.msra.mxu0 0.0
        %295 = vmatprep.subr.mxu0 0.0
        %296 = vmatpush1.msra.mxu0 0.0
        %297 = vmatprep.subr.mxu0 0.0
        %298 = vmatpush1.msra.mxu0 0.0
        %299 = vmatprep.subr.mxu0 0.0
        %300 = vmatpush1.msra.mxu0 0.0
        %301 = vmatprep.subr.mxu0 0.0
        %302 = vmatpush1.msra.mxu0 0.0
        %303 = vmatprep.subr.mxu0 0.0
        %304 = vmatpush1.msra.mxu0 0.0
        %305 = vmatprep.subr.mxu0 0.0
        %306 = vmatpush1.msra.mxu0 0.0
        %307 = vmatprep.subr.mxu0 0.0
        %308 = vmatpush1.msra.mxu0 0.0
        %309 = vmatprep.subr.mxu0 0.0
        %310 = vmatpush1.msra.mxu0 0.0
        %311 = vmatprep.subr.mxu0 0.0
        %312 = vmatpush1.msra.mxu0 0.0
        %313 = vmatprep.subr.mxu0 0.0
        %314 = vmatpush1.msra.mxu0 0.0
        %315 = vmatprep.subr.mxu0 0.0
        %316 = vmatpush1.msra.mxu0 0.0
        %317 = vmatprep.subr.mxu0 0.0
        %318 = vmatpush1.msra.mxu0 0.0
        %319 = vmatprep.subr.mxu0 0.0
        %320 = vmatpush1.msra.mxu0 0.0
        %321 = vmatprep.subr.mxu0 0.0
        %322 = vmatpush1.msra.mxu0 0.0
        %323 = vmatprep.subr.mxu0 0.0
        %324 = vmatpush1.msra.mxu0 0.0
        %325 = vmatprep.subr.mxu0 0.0
        %326 = vmatpush1.msra.mxu0 0.0
        %327 = vmatprep.subr.mxu0 0.0
        %328 = vmatpush1.msra.mxu0 0.0
        %329 = vmatprep.subr.mxu0 0.0
        %330 = vmatpush1.msra.mxu0 0.0
        %331 = vmatprep.subr.mxu0 0.0
        %332 = vmatpush1.msra.mxu0 0.0
        %333 = vmatprep.subr.mxu0 0.0
        %334 = vmatpush1.msra.mxu0 0.0
        %335 = vmatprep.subr.mxu0 0.0
        %336 = vmatpush1.msra.mxu0 0.0
        %337 = vmatprep.subr.mxu0 0.0
        %338 = vmatpush1.msra.mxu0 0.0
        %339 = vmatprep.subr.mxu0 0.0
        %340 = vmatpush1.msra.mxu0 0.0
        %341 = vmatprep.subr.mxu0 0.0
        %342 = vmatpush1.msra.mxu0 0.0
        %343 = vmatprep.subr.mxu0 0.0
        %344 = vmatpush1.msra.mxu0 0.0
        %345 = vmatprep.subr.mxu0 0.0
        %346 = vmatpush1.msra.mxu0 0.0
        %347 = vmatprep.subr.mxu0 0.0
        %348 = vmatpush1.msra.mxu0 0.0
        %349 = vmatprep.mubr.f32.mxu0 0.0
        %350 = vmatmul.mubr.f32.gmra.mrb[0].mxu0 %v283
        %v351 = vpop.f32.mrb[0].mxu0
        %v352 = vadd.f32 %v279, %v351
        %v353 = vpop.f32.mrb[0].mxu0
        %354 = vdwg.mxu0
        %v355 = vmul.f32 %v352, 0.17677669
        %357 = vrot.lane.b32.xlu0 %v352, 96
        %v358 = vpop.permute.xlu0 %357
        %vm359 = vcmask 64512
        %v361 = vsel %vm359, %v355, 0
        %v363 = vsel %vm359, %v358, 0
        %365 = vmatprep.subr.mxu0 0.0
        %366 = vmatpush1.xpose.msra.mxu0 %v363
        %367 = vmatprep.subr.mxu0 0.0
        %368 = vmatpush1.xpose.msra.mxu0 0.0
        %369 = vmatprep.subr.mxu0 0.0
        %370 = vmatpush1.xpose.msra.mxu0 0.0
        %371 = vmatprep.subr.mxu0 0.0
        %372 = vmatpush1.xpose.msra.mxu0 0.0
        %373 = vmatprep.subr.mxu0 0.0
        %374 = vmatpush1.xpose.msra.mxu0 0.0
        %375 = vmatprep.subr.mxu0 0.0
        %376 = vmatpush1.xpose.msra.mxu0 0.0
        %377 = vmatprep.subr.mxu0 0.0
        %378 = vmatpush1.xpose.msra.mxu0 0.0
        %379 = vmatprep.subr.mxu0 0.0
        %380 = vmatpush1.xpose.msra.mxu0 0.0
        %381 = vmatprep.subr.mxu0 0.0
        %382 = vmatpush1.xpose.msra.mxu0 0.0
        %383 = vmatprep.subr.mxu0 0.0
        %384 = vmatpush1.xpose.msra.mxu0 0.0
        %385 = vmatprep.subr.mxu0 0.0
        %386 = vmatpush1.xpose.msra.mxu0 0.0
        %387 = vmatprep.subr.mxu0 0.0
        %388 = vmatpush1.xpose.msra.mxu0 0.0
        %389 = vmatprep.subr.mxu0 0.0
        %390 = vmatpush1.xpose.msra.mxu0 0.0
        %391 = vmatprep.subr.mxu0 0.0
        %392 = vmatpush1.xpose.msra.mxu0 0.0
        %393 = vmatprep.subr.mxu0 0.0
        %394 = vmatpush1.xpose.msra.mxu0 0.0
        %395 = vmatprep.subr.mxu0 0.0
        %396 = vmatpush1.xpose.msra.mxu0 0.0
        %397 = vmatprep.subr.mxu0 0.0
        %398 = vmatpush1.xpose.msra.mxu0 0.0
        %399 = vmatprep.subr.mxu0 0.0
        %400 = vmatpush1.xpose.msra.mxu0 0.0
        %401 = vmatprep.subr.mxu0 0.0
        %402 = vmatpush1.xpose.msra.mxu0 0.0
        %403 = vmatprep.subr.mxu0 0.0
        %404 = vmatpush1.xpose.msra.mxu0 0.0
        %405 = vmatprep.subr.mxu0 0.0
        %406 = vmatpush1.xpose.msra.mxu0 0.0
        %407 = vmatprep.subr.mxu0 0.0
        %408 = vmatpush1.xpose.msra.mxu0 0.0
        %409 = vmatprep.subr.mxu0 0.0
        %410 = vmatpush1.xpose.msra.mxu0 0.0
        %411 = vmatprep.subr.mxu0 0.0
        %412 = vmatpush1.xpose.msra.mxu0 0.0
        %413 = vmatprep.subr.mxu0 0.0
        %414 = vmatpush1.xpose.msra.mxu0 0.0
        %415 = vmatprep.subr.mxu0 0.0
        %416 = vmatpush1.xpose.msra.mxu0 0.0
        %417 = vmatprep.subr.mxu0 0.0
        %418 = vmatpush1.xpose.msra.mxu0 0.0
        %419 = vmatprep.subr.mxu0 0.0
        %420 = vmatpush1.xpose.msra.mxu0 0.0
        %421 = vmatprep.subr.mxu0 0.0
        %422 = vmatpush1.xpose.msra.mxu0 0.0
        %423 = vmatprep.subr.mxu0 0.0
        %424 = vmatpush1.xpose.msra.mxu0 0.0
        %425 = vmatprep.subr.mxu0 0.0
        %426 = vmatpush1.xpose.msra.mxu0 0.0
        %427 = vmatprep.subr.mxu0 0.0
        %428 = vmatpush1.xpose.msra.mxu0 0.0
        %429 = vmatprep.mubr.f32.mxu0 0.0
        %430 = vmatmul.mubr.f32.gmra.mrb[0].mxu0 %v361
        %v431 = vpop.f32.mrb[0].mxu0
        %v432 = vadd.f32 0.0, %v431
        %v433 = vpop.f32.mrb[0].mxu0
        %434 = vdwg.mxu0
        %435 = vrot.lane.b32.xlu0 %v352, 64
        %v436 = vpop.permute.xlu0 %435
        %v439 = vsel %vm359, %v432, 0
        %441 = vmatprep.subr.mxu0 0.0
        %442 = vmatpush1.msra.mxu0 %v436
        %443 = vmatprep.subr.mxu0 0.0
        %444 = vmatpush1.msra.mxu0 0.0
        %445 = vmatprep.subr.mxu0 0.0
        %446 = vmatpush1.msra.mxu0 0.0
        %447 = vmatprep.subr.mxu0 0.0
        %448 = vmatpush1.msra.mxu0 0.0
        %449 = vmatprep.subr.mxu0 0.0
        %450 = vmatpush1.msra.mxu0 0.0
        %451 = vmatprep.subr.mxu0 0.0
        %452 = vmatpush1.msra.mxu0 0.0
        %453 = vmatprep.subr.mxu0 0.0
        %454 = vmatpush1.msra.mxu0 0.0
        %455 = vmatprep.subr.mxu0 0.0
        %456 = vmatpush1.msra.mxu0 0.0
        %457 = vmatprep.subr.mxu0 0.0
        %458 = vmatpush1.msra.mxu0 0.0
        %459 = vmatprep.subr.mxu0 0.0
        %460 = vmatpush1.msra.mxu0 0.0
        %461 = vmatprep.subr.mxu0 0.0
        %462 = vmatpush1.msra.mxu0 0.0
        %463 = vmatprep.subr.mxu0 0.0
        %464 = vmatpush1.msra.mxu0 0.0
        %465 = vmatprep.subr.mxu0 0.0
        %466 = vmatpush1.msra.mxu0 0.0
        %467 = vmatprep.subr.mxu0 0.0
        %468 = vmatpush1.msra.mxu0 0.0
        %469 = vmatprep.subr.mxu0 0.0
        %470 = vmatpush1.msra.mxu0 0.0
        %471 = vmatprep.subr.mxu0 0.0
        %472 = vmatpush1.msra.mxu0 0.0
        %473 = vmatprep.subr.mxu0 0.0
        %474 = vmatpush1.msra.mxu0 0.0
        %475 = vmatprep.subr.mxu0 0.0
        %476 = vmatpush1.msra.mxu0 0.0
        %477 = vmatprep.subr.mxu0 0.0
        %478 = vmatpush1.msra.mxu0 0.0
        %479 = vmatprep.subr.mxu0 0.0
        %480 = vmatpush1.msra.mxu0 0.0
        %481 = vmatprep.subr.mxu0 0.0
        %482 = vmatpush1.msra.mxu0 0.0
        %483 = vmatprep.subr.mxu0 0.0
        %484 = vmatpush1.msra.mxu0 0.0
        %485 = vmatprep.subr.mxu0 0.0
        %486 = vmatpush1.msra.mxu0 0.0
        %487 = vmatprep.subr.mxu0 0.0
        %488 = vmatpush1.msra.mxu0 0.0
        %489 = vmatprep.subr.mxu0 0.0
        %490 = vmatpush1.msra.mxu0 0.0
        %491 = vmatprep.subr.mxu0 0.0
        %492 = vmatpush1.msra.mxu0 0.0
        %493 = vmatprep.subr.mxu0 0.0
        %494 = vmatpush1.msra.mxu0 0.0
        %495 = vmatprep.subr.mxu0 0.0
        %496 = vmatpush1.msra.mxu0 0.0
        %497 = vmatprep.subr.mxu0 0.0
        %498 = vmatpush1.msra.mxu0 0.0
        %499 = vmatprep.subr.mxu0 0.0
        %500 = vmatpush1.msra.mxu0 0.0
        %501 = vmatprep.subr.mxu0 0.0
        %502 = vmatpush1.msra.mxu0 0.0
        %503 = vmatprep.subr.mxu0 0.0
        %504 = vmatpush1.msra.mxu0 0.0
        %505 = vmatprep.mubr.f32.mxu0 0.0
        %506 = vmatmul.mubr.f32.gmra.mrb[0].mxu0 %v439
        %v507 = vpop.f32.mrb[0].mxu0
        %v508 = vadd.f32 0.0, %v507
        %v509 = vpop.f32.mrb[0].mxu0
        %510 = vdwg.mxu0
        %v511 = vld [vmem:[#allocation7] sm:$0xff]
        %512 = vrot.lane.b32.xlu0 %v355, 120
        %v513 = vpop.permute.xlu0 %512
        %514 = vrot.lane.b32.xlu0 %v352, 88
        %v515 = vpop.permute.xlu0 %514
        %v516 = vsel %vm359, %v513, 0
        %v518 = vsel %vm359, %v515, 0
        %520 = vmatprep.subr.mxu0 0.0
        %521 = vmatpush1.xpose.msra.mxu0 %v518
        %522 = vmatprep.subr.mxu0 0.0
        %523 = vmatpush1.xpose.msra.mxu0 0.0
        %524 = vmatprep.subr.mxu0 0.0
        %525 = vmatpush1.xpose.msra.mxu0 0.0
        %526 = vmatprep.subr.mxu0 0.0
        %527 = vmatpush1.xpose.msra.mxu0 0.0
        %528 = vmatprep.subr.mxu0 0.0
        %529 = vmatpush1.xpose.msra.mxu0 0.0
        %530 = vmatprep.subr.mxu0 0.0
        %531 = vmatpush1.xpose.msra.mxu0 0.0
        %532 = vmatprep.subr.mxu0 0.0
        %533 = vmatpush1.xpose.msra.mxu0 0.0
        %534 = vmatprep.subr.mxu0 0.0
        %535 = vmatpush1.xpose.msra.mxu0 0.0
        %536 = vmatprep.subr.mxu0 0.0
        %537 = vmatpush1.xpose.msra.mxu0 0.0
        %538 = vmatprep.subr.mxu0 0.0
        %539 = vmatpush1.xpose.msra.mxu0 0.0
        %540 = vmatprep.subr.mxu0 0.0
        %541 = vmatpush1.xpose.msra.mxu0 0.0
        %542 = vmatprep.subr.mxu0 0.0
        %543 = vmatpush1.xpose.msra.mxu0 0.0
        %544 = vmatprep.subr.mxu0 0.0
        %545 = vmatpush1.xpose.msra.mxu0 0.0
        %546 = vmatprep.subr.mxu0 0.0
        %547 = vmatpush1.xpose.msra.mxu0 0.0
        %548 = vmatprep.subr.mxu0 0.0
        %549 = vmatpush1.xpose.msra.mxu0 0.0
        %550 = vmatprep.subr.mxu0 0.0
        %551 = vmatpush1.xpose.msra.mxu0 0.0
        %552 = vmatprep.subr.mxu0 0.0
        %553 = vmatpush1.xpose.msra.mxu0 0.0
        %554 = vmatprep.subr.mxu0 0.0
        %555 = vmatpush1.xpose.msra.mxu0 0.0
        %556 = vmatprep.subr.mxu0 0.0
        %557 = vmatpush1.xpose.msra.mxu0 0.0
        %558 = vmatprep.subr.mxu0 0.0
        %559 = vmatpush1.xpose.msra.mxu0 0.0
        %560 = vmatprep.subr.mxu0 0.0
        %561 = vmatpush1.xpose.msra.mxu0 0.0
        %562 = vmatprep.subr.mxu0 0.0
        %563 = vmatpush1.xpose.msra.mxu0 0.0
        %564 = vmatprep.subr.mxu0 0.0
        %565 = vmatpush1.xpose.msra.mxu0 0.0
        %566 = vmatprep.subr.mxu0 0.0
        %567 = vmatpush1.xpose.msra.mxu0 0.0
        %568 = vmatprep.subr.mxu0 0.0
        %569 = vmatpush1.xpose.msra.mxu0 0.0
        %570 = vmatprep.subr.mxu0 0.0
        %571 = vmatpush1.xpose.msra.mxu0 0.0
        %572 = vmatprep.subr.mxu0 0.0
        %573 = vmatpush1.xpose.msra.mxu0 0.0
        %574 = vmatprep.subr.mxu0 0.0
        %575 = vmatpush1.xpose.msra.mxu0 0.0
        %576 = vmatprep.subr.mxu0 0.0
        %577 = vmatpush1.xpose.msra.mxu0 0.0
        %578 = vmatprep.subr.mxu0 0.0
        %579 = vmatpush1.xpose.msra.mxu0 0.0
        %580 = vmatprep.subr.mxu0 0.0
        %581 = vmatpush1.xpose.msra.mxu0 0.0
        %582 = vmatprep.subr.mxu0 0.0
        %583 = vmatpush1.xpose.msra.mxu0 0.0
        %584 = vmatprep.mubr.f32.mxu0 0.0
        %585 = vmatmul.mubr.f32.gmra.mrb[0].mxu0 %v516
        %v586 = vpop.f32.mrb[0].mxu0
        %v587 = vadd.f32 0.0, %v586
        %v588 = vpop.f32.mrb[0].mxu0
        %589 = vdwg.mxu0
        %590 = vrot.lane.b32.xlu0 %v352, 56
        %v591 = vpop.permute.xlu0 %590
        %v594 = vsel %vm359, %v587, 0
        %596 = vmatprep.subr.mxu0 0.0
        %597 = vmatpush1.msra.mxu0 %v591
        %598 = vmatprep.subr.mxu0 0.0
        %599 = vmatpush1.msra.mxu0 0.0
        %600 = vmatprep.subr.mxu0 0.0
        %601 = vmatpush1.msra.mxu0 0.0
        %602 = vmatprep.subr.mxu0 0.0
        %603 = vmatpush1.msra.mxu0 0.0
        %604 = vmatprep.subr.mxu0 0.0
        %605 = vmatpush1.msra.mxu0 0.0
        %606 = vmatprep.subr.mxu0 0.0
        %607 = vmatpush1.msra.mxu0 0.0
        %608 = vmatprep.subr.mxu0 0.0
        %609 = vmatpush1.msra.mxu0 0.0
        %610 = vmatprep.subr.mxu0 0.0
        %611 = vmatpush1.msra.mxu0 0.0
        %612 = vmatprep.subr.mxu0 0.0
        %613 = vmatpush1.msra.mxu0 0.0
        %614 = vmatprep.subr.mxu0 0.0
        %615 = vmatpush1.msra.mxu0 0.0
        %616 = vmatprep.subr.mxu0 0.0
        %617 = vmatpush1.msra.mxu0 0.0
        %618 = vmatprep.subr.mxu0 0.0
        %619 = vmatpush1.msra.mxu0 0.0
        %620 = vmatprep.subr.mxu0 0.0
        %621 = vmatpush1.msra.mxu0 0.0
        %622 = vmatprep.subr.mxu0 0.0
        %623 = vmatpush1.msra.mxu0 0.0
        %624 = vmatprep.subr.mxu0 0.0
        %625 = vmatpush1.msra.mxu0 0.0
        %626 = vmatprep.subr.mxu0 0.0
        %627 = vmatpush1.msra.mxu0 0.0
        %628 = vmatprep.subr.mxu0 0.0
        %629 = vmatpush1.msra.mxu0 0.0
        %630 = vmatprep.subr.mxu0 0.0
        %631 = vmatpush1.msra.mxu0 0.0
        %632 = vmatprep.subr.mxu0 0.0
        %633 = vmatpush1.msra.mxu0 0.0
        %634 = vmatprep.subr.mxu0 0.0
        %635 = vmatpush1.msra.mxu0 0.0
        %636 = vmatprep.subr.mxu0 0.0
        %637 = vmatpush1.msra.mxu0 0.0
        %638 = vmatprep.subr.mxu0 0.0
        %639 = vmatpush1.msra.mxu0 0.0
        %640 = vmatprep.subr.mxu0 0.0
        %641 = vmatpush1.msra.mxu0 0.0
        %642 = vmatprep.subr.mxu0 0.0
        %643 = vmatpush1.msra.mxu0 0.0
        %644 = vmatprep.subr.mxu0 0.0
        %645 = vmatpush1.msra.mxu0 0.0
        %646 = vmatprep.subr.mxu0 0.0
        %647 = vmatpush1.msra.mxu0 0.0
        %648 = vmatprep.subr.mxu0 0.0
        %649 = vmatpush1.msra.mxu0 0.0
        %650 = vmatprep.subr.mxu0 0.0
        %651 = vmatpush1.msra.mxu0 0.0
        %652 = vmatprep.subr.mxu0 0.0
        %653 = vmatpush1.msra.mxu0 0.0
        %654 = vmatprep.subr.mxu0 0.0
        %655 = vmatpush1.msra.mxu0 0.0
        %656 = vmatprep.subr.mxu0 0.0
        %657 = vmatpush1.msra.mxu0 0.0
        %658 = vmatprep.subr.mxu0 0.0
        %659 = vmatpush1.msra.mxu0 0.0
        %660 = vmatprep.mubr.f32.mxu0 0.0
        %661 = vmatmul.mubr.f32.gmra.mrb[0].mxu0 %v594
        %v662 = vpop.f32.mrb[0].mxu0
        %v663 = vadd.f32 0.0, %v662
        %v664 = vpop.f32.mrb[0].mxu0
        %665 = vdwg.mxu0
        %s666 = scalar_lea.vmem [#allocation7], 8
        %v667 = vld [vmem:[%s666] sm:$0xff]
        %v669 = vsel %vm359, %v663, 0
        %671 = vmatprep.subr.mxu0 0.0
        %672 = vmatpush1.msra.mxu0 %v667
        %673 = vmatprep.subr.mxu0 0.0
        %674 = vmatpush1.msra.mxu0 0.0
        %675 = vmatprep.subr.mxu0 0.0
        %676 = vmatpush1.msra.mxu0 0.0
        %677 = vmatprep.subr.mxu0 0.0
        %678 = vmatpush1.msra.mxu0 0.0
        %679 = vmatprep.subr.mxu0 0.0
        %680 = vmatpush1.msra.mxu0 0.0
        %681 = vmatprep.subr.mxu0 0.0
        %682 = vmatpush1.msra.mxu0 0.0
        %683 = vmatprep.subr.mxu0 0.0
        %684 = vmatpush1.msra.mxu0 0.0
        %685 = vmatprep.subr.mxu0 0.0
        %686 = vmatpush1.msra.mxu0 0.0
        %687 = vmatprep.subr.mxu0 0.0
        %688 = vmatpush1.msra.mxu0 0.0
        %689 = vmatprep.subr.mxu0 0.0
        %690 = vmatpush1.msra.mxu0 0.0
        %691 = vmatprep.subr.mxu0 0.0
        %692 = vmatpush1.msra.mxu0 0.0
        %693 = vmatprep.subr.mxu0 0.0
        %694 = vmatpush1.msra.mxu0 0.0
        %695 = vmatprep.subr.mxu0 0.0
        %696 = vmatpush1.msra.mxu0 0.0
        %697 = vmatprep.subr.mxu0 0.0
        %698 = vmatpush1.msra.mxu0 0.0
        %699 = vmatprep.subr.mxu0 0.0
        %700 = vmatpush1.msra.mxu0 0.0
        %701 = vmatprep.subr.mxu0 0.0
        %702 = vmatpush1.msra.mxu0 0.0
        %703 = vmatprep.subr.mxu0 0.0
        %704 = vmatpush1.msra.mxu0 0.0
        %705 = vmatprep.subr.mxu0 0.0
        %706 = vmatpush1.msra.mxu0 0.0
        %707 = vmatprep.subr.mxu0 0.0
        %708 = vmatpush1.msra.mxu0 0.0
        %709 = vmatprep.subr.mxu0 0.0
        %710 = vmatpush1.msra.mxu0 0.0
        %711 = vmatprep.subr.mxu0 0.0
        %712 = vmatpush1.msra.mxu0 0.0
        %713 = vmatprep.subr.mxu0 0.0
        %714 = vmatpush1.msra.mxu0 0.0
        %715 = vmatprep.subr.mxu0 0.0
        %716 = vmatpush1.msra.mxu0 0.0
        %717 = vmatprep.subr.mxu0 0.0
        %718 = vmatpush1.msra.mxu0 0.0
        %719 = vmatprep.subr.mxu0 0.0
        %720 = vmatpush1.msra.mxu0 0.0
        %721 = vmatprep.subr.mxu0 0.0
        %722 = vmatpush1.msra.mxu0 0.0
        %723 = vmatprep.subr.mxu0 0.0
        %724 = vmatpush1.msra.mxu0 0.0
        %725 = vmatprep.subr.mxu0 0.0
        %726 = vmatpush1.msra.mxu0 0.0
        %727 = vmatprep.subr.mxu0 0.0
        %728 = vmatpush1.msra.mxu0 0.0
        %729 = vmatprep.subr.mxu0 0.0
        %730 = vmatpush1.msra.mxu0 0.0
        %731 = vmatprep.subr.mxu0 0.0
        %732 = vmatpush1.msra.mxu0 0.0
        %733 = vmatprep.subr.mxu0 0.0
        %734 = vmatpush1.msra.mxu0 0.0
        %735 = vmatprep.mubr.f32.mxu0 0.0
        %736 = vmatmul.mubr.f32.gmra.mrb[0].mxu0 %v669
        %v737 = vpop.f32.mrb[0].mxu0
        %v738 = vadd.f32 0.0, %v737
        %v739 = vpop.f32.mrb[0].mxu0
        %740 = vdwg.mxu0
        %v742 = vsel %vm359, %v508, 0
        %744 = vmatprep.subr.mxu0 0.0
        %745 = vmatpush1.msra.mxu0 %v511
        %746 = vmatprep.subr.mxu0 0.0
        %747 = vmatpush1.msra.mxu0 0.0
        %748 = vmatprep.subr.mxu0 0.0
        %749 = vmatpush1.msra.mxu0 0.0
        %750 = vmatprep.subr.mxu0 0.0
        %751 = vmatpush1.msra.mxu0 0.0
        %752 = vmatprep.subr.mxu0 0.0
        %753 = vmatpush1.msra.mxu0 0.0
        %754 = vmatprep.subr.mxu0 0.0
        %755 = vmatpush1.msra.mxu0 0.0
        %756 = vmatprep.subr.mxu0 0.0
        %757 = vmatpush1.msra.mxu0 0.0
        %758 = vmatprep.subr.mxu0 0.0
        %759 = vmatpush1.msra.mxu0 0.0
        %760 = vmatprep.subr.mxu0 0.0
        %761 = vmatpush1.msra.mxu0 0.0
        %762 = vmatprep.subr.mxu0 0.0
        %763 = vmatpush1.msra.mxu0 0.0
        %764 = vmatprep.subr.mxu0 0.0
        %765 = vmatpush1.msra.mxu0 0.0
        %766 = vmatprep.subr.mxu0 0.0
        %767 = vmatpush1.msra.mxu0 0.0
        %768 = vmatprep.subr.mxu0 0.0
        %769 = vmatpush1.msra.mxu0 0.0
        %770 = vmatprep.subr.mxu0 0.0
        %771 = vmatpush1.msra.mxu0 0.0
        %772 = vmatprep.subr.mxu0 0.0
        %773 = vmatpush1.msra.mxu0 0.0
        %774 = vmatprep.subr.mxu0 0.0
        %775 = vmatpush1.msra.mxu0 0.0
        %776 = vmatprep.subr.mxu0 0.0
        %777 = vmatpush1.msra.mxu0 0.0
        %778 = vmatprep.subr.mxu0 0.0
        %779 = vmatpush1.msra.mxu0 0.0
        %780 = vmatprep.subr.mxu0 0.0
        %781 = vmatpush1.msra.mxu0 0.0
        %782 = vmatprep.subr.mxu0 0.0
        %783 = vmatpush1.msra.mxu0 0.0
        %784 = vmatprep.subr.mxu0 0.0
        %785 = vmatpush1.msra.mxu0 0.0
        %786 = vmatprep.subr.mxu0 0.0
        %787 = vmatpush1.msra.mxu0 0.0
        %788 = vmatprep.subr.mxu0 0.0
        %789 = vmatpush1.msra.mxu0 0.0
        %790 = vmatprep.subr.mxu0 0.0
        %791 = vmatpush1.msra.mxu0 0.0
        %792 = vmatprep.subr.mxu0 0.0
        %793 = vmatpush1.msra.mxu0 0.0
        %794 = vmatprep.subr.mxu0 0.0
        %795 = vmatpush1.msra.mxu0 0.0
        %796 = vmatprep.subr.mxu0 0.0
        %797 = vmatpush1.msra.mxu0 0.0
        %798 = vmatprep.subr.mxu0 0.0
        %799 = vmatpush1.msra.mxu0 0.0
        %800 = vmatprep.subr.mxu0 0.0
        %801 = vmatpush1.msra.mxu0 0.0
        %802 = vmatprep.subr.mxu0 0.0
        %803 = vmatpush1.msra.mxu0 0.0
        %804 = vmatprep.subr.mxu0 0.0
        %805 = vmatpush1.msra.mxu0 0.0
        %806 = vmatprep.subr.mxu0 0.0
        %807 = vmatpush1.msra.mxu0 0.0
        %808 = vmatprep.mubr.f32.mxu0 0.0
        %809 = vmatmul.mubr.f32.gmra.mrb[0].mxu0 %v742
        %v810 = vpop.f32.mrb[0].mxu0
        %v811 = vadd.f32 %v738, %v810
        %v812 = vpop.f32.mrb[0].mxu0
        %813 = vdwg.mxu0
        %814 = vrot.lane.b32.xlu0 %v355, 112
        %v815 = vpop.permute.xlu0 %814
        %816 = vrot.lane.b32.xlu0 %v352, 80
        %v817 = vpop.permute.xlu0 %816
        %v818 = vsel %vm359, %v815, 0
        %v820 = vsel %vm359, %v817, 0
        %822 = vmatprep.subr.mxu0 0.0
        %823 = vmatpush1.xpose.msra.mxu0 %v820
        %824 = vmatprep.subr.mxu0 0.0
        %825 = vmatpush1.xpose.msra.mxu0 0.0
        %826 = vmatprep.subr.mxu0 0.0
        %827 = vmatpush1.xpose.msra.mxu0 0.0
        %828 = vmatprep.subr.mxu0 0.0
        %829 = vmatpush1.xpose.msra.mxu0 0.0
        %830 = vmatprep.subr.mxu0 0.0
        %831 = vmatpush1.xpose.msra.mxu0 0.0
        %832 = vmatprep.subr.mxu0 0.0
        %833 = vmatpush1.xpose.msra.mxu0 0.0
        %834 = vmatprep.subr.mxu0 0.0
        %835 = vmatpush1.xpose.msra.mxu0 0.0
        %836 = vmatprep.subr.mxu0 0.0
        %837 = vmatpush1.xpose.msra.mxu0 0.0
        %838 = vmatprep.subr.mxu0 0.0
        %839 = vmatpush1.xpose.msra.mxu0 0.0
        %840 = vmatprep.subr.mxu0 0.0
        %841 = vmatpush1.xpose.msra.mxu0 0.0
        %842 = vmatprep.subr.mxu0 0.0
        %843 = vmatpush1.xpose.msra.mxu0 0.0
        %844 = vmatprep.subr.mxu0 0.0
        %845 = vmatpush1.xpose.msra.mxu0 0.0
        %846 = vmatprep.subr.mxu0 0.0
        %847 = vmatpush1.xpose.msra.mxu0 0.0
        %848 = vmatprep.subr.mxu0 0.0
        %849 = vmatpush1.xpose.msra.mxu0 0.0
        %850 = vmatprep.subr.mxu0 0.0
        %851 = vmatpush1.xpose.msra.mxu0 0.0
        %852 = vmatprep.subr.mxu0 0.0
        %853 = vmatpush1.xpose.msra.mxu0 0.0
        %854 = vmatprep.subr.mxu0 0.0
        %855 = vmatpush1.xpose.msra.mxu0 0.0
        %856 = vmatprep.subr.mxu0 0.0
        %857 = vmatpush1.xpose.msra.mxu0 0.0
        %858 = vmatprep.subr.mxu0 0.0
        %859 = vmatpush1.xpose.msra.mxu0 0.0
        %860 = vmatprep.subr.mxu0 0.0
        %861 = vmatpush1.xpose.msra.mxu0 0.0
        %862 = vmatprep.subr.mxu0 0.0
        %863 = vmatpush1.xpose.msra.mxu0 0.0
        %864 = vmatprep.subr.mxu0 0.0
        %865 = vmatpush1.xpose.msra.mxu0 0.0
        %866 = vmatprep.subr.mxu0 0.0
        %867 = vmatpush1.xpose.msra.mxu0 0.0
        %868 = vmatprep.subr.mxu0 0.0
        %869 = vmatpush1.xpose.msra.mxu0 0.0
        %870 = vmatprep.subr.mxu0 0.0
        %871 = vmatpush1.xpose.msra.mxu0 0.0
        %872 = vmatprep.subr.mxu0 0.0
        %873 = vmatpush1.xpose.msra.mxu0 0.0
        %874 = vmatprep.subr.mxu0 0.0
        %875 = vmatpush1.xpose.msra.mxu0 0.0
        %876 = vmatprep.subr.mxu0 0.0
        %877 = vmatpush1.xpose.msra.mxu0 0.0
        %878 = vmatprep.subr.mxu0 0.0
        %879 = vmatpush1.xpose.msra.mxu0 0.0
        %880 = vmatprep.subr.mxu0 0.0
        %881 = vmatpush1.xpose.msra.mxu0 0.0
        %882 = vmatprep.subr.mxu0 0.0
        %883 = vmatpush1.xpose.msra.mxu0 0.0
        %884 = vmatprep.subr.mxu0 0.0
        %885 = vmatpush1.xpose.msra.mxu0 0.0
        %886 = vmatprep.mubr.f32.mxu0 0.0
        %887 = vmatmul.mubr.f32.gmra.mrb[0].mxu0 %v818
        %v888 = vpop.f32.mrb[0].mxu0
        %v889 = vadd.f32 0.0, %v888
        %v890 = vpop.f32.mrb[0].mxu0
        %891 = vdwg.mxu0
        %892 = vrot.lane.b32.xlu0 %v352, 48
        %v893 = vpop.permute.xlu0 %892
        %v896 = vsel %vm359, %v889, 0
        %898 = vmatprep.subr.mxu0 0.0
        %899 = vmatpush1.msra.mxu0 %v893
        %900 = vmatprep.subr.mxu0 0.0
        %901 = vmatpush1.msra.mxu0 0.0
        %902 = vmatprep.subr.mxu0 0.0
        %903 = vmatpush1.msra.mxu0 0.0
        %904 = vmatprep.subr.mxu0 0.0
        %905 = vmatpush1.msra.mxu0 0.0
        %906 = vmatprep.subr.mxu0 0.0
        %907 = vmatpush1.msra.mxu0 0.0
        %908 = vmatprep.subr.mxu0 0.0
        %909 = vmatpush1.msra.mxu0 0.0
        %910 = vmatprep.subr.mxu0 0.0
        %911 = vmatpush1.msra.mxu0 0.0
        %912 = vmatprep.subr.mxu0 0.0
        %913 = vmatpush1.msra.mxu0 0.0
        %914 = vmatprep.subr.mxu0 0.0
        %915 = vmatpush1.msra.mxu0 0.0
        %916 = vmatprep.subr.mxu0 0.0
        %917 = vmatpush1.msra.mxu0 0.0
        %918 = vmatprep.subr.mxu0 0.0
        %919 = vmatpush1.msra.mxu0 0.0
        %920 = vmatprep.subr.mxu0 0.0
        %921 = vmatpush1.msra.mxu0 0.0
        %922 = vmatprep.subr.mxu0 0.0
        %923 = vmatpush1.msra.mxu0 0.0
        %924 = vmatprep.subr.mxu0 0.0
        %925 = vmatpush1.msra.mxu0 0.0
        %926 = vmatprep.subr.mxu0 0.0
        %927 = vmatpush1.msra.mxu0 0.0
        %928 = vmatprep.subr.mxu0 0.0
        %929 = vmatpush1.msra.mxu0 0.0
        %930 = vmatprep.subr.mxu0 0.0
        %931 = vmatpush1.msra.mxu0 0.0
        %932 = vmatprep.subr.mxu0 0.0
        %933 = vmatpush1.msra.mxu0 0.0
        %934 = vmatprep.subr.mxu0 0.0
        %935 = vmatpush1.msra.mxu0 0.0
        %936 = vmatprep.subr.mxu0 0.0
        %937 = vmatpush1.msra.mxu0 0.0
        %938 = vmatprep.subr.mxu0 0.0
        %939 = vmatpush1.msra.mxu0 0.0
        %940 = vmatprep.subr.mxu0 0.0
        %941 = vmatpush1.msra.mxu0 0.0
        %942 = vmatprep.subr.mxu0 0.0
        %943 = vmatpush1.msra.mxu0 0.0
        %944 = vmatprep.subr.mxu0 0.0
        %945 = vmatpush1.msra.mxu0 0.0
        %946 = vmatprep.subr.mxu0 0.0
        %947 = vmatpush1.msra.mxu0 0.0
        %948 = vmatprep.subr.mxu0 0.0
        %949 = vmatpush1.msra.mxu0 0.0
        %950 = vmatprep.subr.mxu0 0.0
        %951 = vmatpush1.msra.mxu0 0.0
        %952 = vmatprep.subr.mxu0 0.0
        %953 = vmatpush1.msra.mxu0 0.0
        %954 = vmatprep.subr.mxu0 0.0
        %955 = vmatpush1.msra.mxu0 0.0
        %956 = vmatprep.subr.mxu0 0.0
        %957 = vmatpush1.msra.mxu0 0.0
        %958 = vmatprep.subr.mxu0 0.0
        %959 = vmatpush1.msra.mxu0 0.0
        %960 = vmatprep.subr.mxu0 0.0
        %961 = vmatpush1.msra.mxu0 0.0
        %962 = vmatprep.mubr.f32.mxu0 0.0
        %963 = vmatmul.mubr.f32.gmra.mrb[0].mxu0 %v896
        %v964 = vpop.f32.mrb[0].mxu0
        %v965 = vadd.f32 0.0, %v964
        %v966 = vpop.f32.mrb[0].mxu0
        %967 = vdwg.mxu0
        %s968 = scalar_lea.vmem [#allocation7], 16
        %v969 = vld [vmem:[%s968] sm:$0xff]
        %v971 = vsel %vm359, %v965, 0
        %973 = vmatprep.subr.mxu0 0.0
        %974 = vmatpush1.msra.mxu0 %v969
        %975 = vmatprep.subr.mxu0 0.0
        %976 = vmatpush1.msra.mxu0 0.0
        %977 = vmatprep.subr.mxu0 0.0
        %978 = vmatpush1.msra.mxu0 0.0
        %979 = vmatprep.subr.mxu0 0.0
        %980 = vmatpush1.msra.mxu0 0.0
        %981 = vmatprep.subr.mxu0 0.0
        %982 = vmatpush1.msra.mxu0 0.0
        %983 = vmatprep.subr.mxu0 0.0
        %984 = vmatpush1.msra.mxu0 0.0
        %985 = vmatprep.subr.mxu0 0.0
        %986 = vmatpush1.msra.mxu0 0.0
        %987 = vmatprep.subr.mxu0 0.0
        %988 = vmatpush1.msra.mxu0 0.0
        %989 = vmatprep.subr.mxu0 0.0
        %990 = vmatpush1.msra.mxu0 0.0
        %991 = vmatprep.subr.mxu0 0.0
        %992 = vmatpush1.msra.mxu0 0.0
        %993 = vmatprep.subr.mxu0 0.0
        %994 = vmatpush1.msra.mxu0 0.0
        %995 = vmatprep.subr.mxu0 0.0
        %996 = vmatpush1.msra.mxu0 0.0
        %997 = vmatprep.subr.mxu0 0.0
        %998 = vmatpush1.msra.mxu0 0.0
        %999 = vmatprep.subr.mxu0 0.0
        %1000 = vmatpush1.msra.mxu0 0.0
        %1001 = vmatprep.subr.mxu0 0.0
        %1002 = vmatpush1.msra.mxu0 0.0
        %1003 = vmatprep.subr.mxu0 0.0
        %1004 = vmatpush1.msra.mxu0 0.0
        %1005 = vmatprep.subr.mxu0 0.0
        %1006 = vmatpush1.msra.mxu0 0.0
        %1007 = vmatprep.subr.mxu0 0.0
        %1008 = vmatpush1.msra.mxu0 0.0
        %1009 = vmatprep.subr.mxu0 0.0
        %1010 = vmatpush1.msra.mxu0 0.0
        %1011 = vmatprep.subr.mxu0 0.0
        %1012 = vmatpush1.msra.mxu0 0.0
        %1013 = vmatprep.subr.mxu0 0.0
        %1014 = vmatpush1.msra.mxu0 0.0
        %1015 = vmatprep.subr.mxu0 0.0
        %1016 = vmatpush1.msra.mxu0 0.0
        %1017 = vmatprep.subr.mxu0 0.0
        %1018 = vmatpush1.msra.mxu0 0.0
        %1019 = vmatprep.subr.mxu0 0.0
        %1020 = vmatpush1.msra.mxu0 0.0
        %1021 = vmatprep.subr.mxu0 0.0
        %1022 = vmatpush1.msra.mxu0 0.0
        %1023 = vmatprep.subr.mxu0 0.0
        %1024 = vmatpush1.msra.mxu0 0.0
        %1025 = vmatprep.subr.mxu0 0.0
        %1026 = vmatpush1.msra.mxu0 0.0
        %1027 = vmatprep.subr.mxu0 0.0
        %1028 = vmatpush1.msra.mxu0 0.0
        %1029 = vmatprep.subr.mxu0 0.0
        %1030 = vmatpush1.msra.mxu0 0.0
        %1031 = vmatprep.subr.mxu0 0.0
        %1032 = vmatpush1.msra.mxu0 0.0
        %1033 = vmatprep.subr.mxu0 0.0
        %1034 = vmatpush1.msra.mxu0 0.0
        %1035 = vmatprep.subr.mxu0 0.0
        %1036 = vmatpush1.msra.mxu0 0.0
        %1037 = vmatprep.mubr.f32.mxu0 0.0
        %1038 = vmatmul.mubr.f32.gmra.mrb[0].mxu0 %v971
        %v1039 = vpop.f32.mrb[0].mxu0
        %v1040 = vadd.f32 0.0, %v1039
        %v1041 = vpop.f32.mrb[0].mxu0
        %1042 = vdwg.mxu0
        %v1043 = vadd.f32 %v811, %v1040
        %1044 = vrot.lane.b32.xlu0 %v355, 104
        %v1045 = vpop.permute.xlu0 %1044
        %1046 = vrot.lane.b32.xlu0 %v352, 72
        %v1047 = vpop.permute.xlu0 %1046
        %v1048 = vsel %vm359, %v1045, 0
        %v1050 = vsel %vm359, %v1047, 0
        %1052 = vmatprep.subr.mxu0 0.0
        %1053 = vmatpush1.xpose.msra.mxu0 %v1050
        %1054 = vmatprep.subr.mxu0 0.0
        %1055 = vmatpush1.xpose.msra.mxu0 0.0
        %1056 = vmatprep.subr.mxu0 0.0
        %1057 = vmatpush1.xpose.msra.mxu0 0.0
        %1058 = vmatprep.subr.mxu0 0.0
        %1059 = vmatpush1.xpose.msra.mxu0 0.0
        %1060 = vmatprep.subr.mxu0 0.0
        %1061 = vmatpush1.xpose.msra.mxu0 0.0
        %1062 = vmatprep.subr.mxu0 0.0
        %1063 = vmatpush1.xpose.msra.mxu0 0.0
        %1064 = vmatprep.subr.mxu0 0.0
        %1065 = vmatpush1.xpose.msra.mxu0 0.0
        %1066 = vmatprep.subr.mxu0 0.0
        %1067 = vmatpush1.xpose.msra.mxu0 0.0
        %1068 = vmatprep.subr.mxu0 0.0
        %1069 = vmatpush1.xpose.msra.mxu0 0.0
        %1070 = vmatprep.subr.mxu0 0.0
        %1071 = vmatpush1.xpose.msra.mxu0 0.0
        %1072 = vmatprep.subr.mxu0 0.0
        %1073 = vmatpush1.xpose.msra.mxu0 0.0
        %1074 = vmatprep.subr.mxu0 0.0
        %1075 = vmatpush1.xpose.msra.mxu0 0.0
        %1076 = vmatprep.subr.mxu0 0.0
        %1077 = vmatpush1.xpose.msra.mxu0 0.0
        %1078 = vmatprep.subr.mxu0 0.0
        %1079 = vmatpush1.xpose.msra.mxu0 0.0
        %1080 = vmatprep.subr.mxu0 0.0
        %1081 = vmatpush1.xpose.msra.mxu0 0.0
        %1082 = vmatprep.subr.mxu0 0.0
        %1083 = vmatpush1.xpose.msra.mxu0 0.0
        %1084 = vmatprep.subr.mxu0 0.0
        %1085 = vmatpush1.xpose.msra.mxu0 0.0
        %1086 = vmatprep.subr.mxu0 0.0
        %1087 = vmatpush1.xpose.msra.mxu0 0.0
        %1088 = vmatprep.subr.mxu0 0.0
        %1089 = vmatpush1.xpose.msra.mxu0 0.0
        %1090 = vmatprep.subr.mxu0 0.0
        %1091 = vmatpush1.xpose.msra.mxu0 0.0
        %1092 = vmatprep.subr.mxu0 0.0
        %1093 = vmatpush1.xpose.msra.mxu0 0.0
        %1094 = vmatprep.subr.mxu0 0.0
        %1095 = vmatpush1.xpose.msra.mxu0 0.0
        %1096 = vmatprep.subr.mxu0 0.0
        %1097 = vmatpush1.xpose.msra.mxu0 0.0
        %1098 = vmatprep.subr.mxu0 0.0
        %1099 = vmatpush1.xpose.msra.mxu0 0.0
        %1100 = vmatprep.subr.mxu0 0.0
        %1101 = vmatpush1.xpose.msra.mxu0 0.0
        %1102 = vmatprep.subr.mxu0 0.0
        %1103 = vmatpush1.xpose.msra.mxu0 0.0
        %1104 = vmatprep.subr.mxu0 0.0
        %1105 = vmatpush1.xpose.msra.mxu0 0.0
        %1106 = vmatprep.subr.mxu0 0.0
        %1107 = vmatpush1.xpose.msra.mxu0 0.0
        %1108 = vmatprep.subr.mxu0 0.0
        %1109 = vmatpush1.xpose.msra.mxu0 0.0
        %1110 = vmatprep.subr.mxu0 0.0
        %1111 = vmatpush1.xpose.msra.mxu0 0.0
        %1112 = vmatprep.subr.mxu0 0.0
        %1113 = vmatpush1.xpose.msra.mxu0 0.0
        %1114 = vmatprep.subr.mxu0 0.0
        %1115 = vmatpush1.xpose.msra.mxu0 0.0
        %1116 = vmatprep.mubr.f32.mxu0 0.0
        %1117 = vmatmul.mubr.f32.gmra.mrb[0].mxu0 %v1048
        %v1118 = vpop.f32.mrb[0].mxu0
        %v1119 = vadd.f32 0.0, %v1118
        %v1120 = vpop.f32.mrb[0].mxu0
        %1121 = vdwg.mxu0
        %1122 = vrot.lane.b32.xlu0 %v352, 40
        %v1123 = vpop.permute.xlu0 %1122
        %v1126 = vsel %vm359, %v1119, 0
        %1128 = vmatprep.subr.mxu0 0.0
        %1129 = vmatpush1.msra.mxu0 %v1123
        %1130 = vmatprep.subr.mxu0 0.0
        %1131 = vmatpush1.msra.mxu0 0.0
        %1132 = vmatprep.subr.mxu0 0.0
        %1133 = vmatpush1.msra.mxu0 0.0
        %1134 = vmatprep.subr.mxu0 0.0
        %1135 = vmatpush1.msra.mxu0 0.0
        %1136 = vmatprep.subr.mxu0 0.0
        %1137 = vmatpush1.msra.mxu0 0.0
        %1138 = vmatprep.subr.mxu0 0.0
        %1139 = vmatpush1.msra.mxu0 0.0
        %1140 = vmatprep.subr.mxu0 0.0
        %1141 = vmatpush1.msra.mxu0 0.0
        %1142 = vmatprep.subr.mxu0 0.0
        %1143 = vmatpush1.msra.mxu0 0.0
        %1144 = vmatprep.subr.mxu0 0.0
        %1145 = vmatpush1.msra.mxu0 0.0
        %1146 = vmatprep.subr.mxu0 0.0
        %1147 = vmatpush1.msra.mxu0 0.0
        %1148 = vmatprep.subr.mxu0 0.0
        %1149 = vmatpush1.msra.mxu0 0.0
        %1150 = vmatprep.subr.mxu0 0.0
        %1151 = vmatpush1.msra.mxu0 0.0
        %1152 = vmatprep.subr.mxu0 0.0
        %1153 = vmatpush1.msra.mxu0 0.0
        %1154 = vmatprep.subr.mxu0 0.0
        %1155 = vmatpush1.msra.mxu0 0.0
        %1156 = vmatprep.subr.mxu0 0.0
        %1157 = vmatpush1.msra.mxu0 0.0
        %1158 = vmatprep.subr.mxu0 0.0
        %1159 = vmatpush1.msra.mxu0 0.0
        %1160 = vmatprep.subr.mxu0 0.0
        %1161 = vmatpush1.msra.mxu0 0.0
        %1162 = vmatprep.subr.mxu0 0.0
        %1163 = vmatpush1.msra.mxu0 0.0
        %1164 = vmatprep.subr.mxu0 0.0
        %1165 = vmatpush1.msra.mxu0 0.0
        %1166 = vmatprep.subr.mxu0 0.0
        %1167 = vmatpush1.msra.mxu0 0.0
        %1168 = vmatprep.subr.mxu0 0.0
        %1169 = vmatpush1.msra.mxu0 0.0
        %1170 = vmatprep.subr.mxu0 0.0
        %1171 = vmatpush1.msra.mxu0 0.0
        %1172 = vmatprep.subr.mxu0 0.0
        %1173 = vmatpush1.msra.mxu0 0.0
        %1174 = vmatprep.subr.mxu0 0.0
        %1175 = vmatpush1.msra.mxu0 0.0
        %1176 = vmatprep.subr.mxu0 0.0
        %1177 = vmatpush1.msra.mxu0 0.0
        %1178 = vmatprep.subr.mxu0 0.0
        %1179 = vmatpush1.msra.mxu0 0.0
        %1180 = vmatprep.subr.mxu0 0.0
        %1181 = vmatpush1.msra.mxu0 0.0
        %1182 = vmatprep.subr.mxu0 0.0
        %1183 = vmatpush1.msra.mxu0 0.0
        %1184 = vmatprep.subr.mxu0 0.0
        %1185 = vmatpush1.msra.mxu0 0.0
        %1186 = vmatprep.subr.mxu0 0.0
        %1187 = vmatpush1.msra.mxu0 0.0
        %1188 = vmatprep.subr.mxu0 0.0
        %1189 = vmatpush1.msra.mxu0 0.0
        %1190 = vmatprep.subr.mxu0 0.0
        %1191 = vmatpush1.msra.mxu0 0.0
        %1192 = vmatprep.mubr.f32.mxu0 0.0
        %1193 = vmatmul.mubr.f32.gmra.mrb[0].mxu0 %v1126
        %v1194 = vpop.f32.mrb[0].mxu0
        %v1195 = vadd.f32 0.0, %v1194
        %v1196 = vpop.f32.mrb[0].mxu0
        %1197 = vdwg.mxu0
        %s1198 = scalar_lea.vmem [#allocation7], 24
        %v1199 = vld [vmem:[%s1198] sm:$0xff]
        %v1201 = vsel %vm359, %v1195, 0
        %1203 = vmatprep.subr.mxu0 0.0
        %1204 = vmatpush1.msra.mxu0 %v1199
        %1205 = vmatprep.subr.mxu0 0.0
        %1206 = vmatpush1.msra.mxu0 0.0
        %1207 = vmatprep.subr.mxu0 0.0
        %1208 = vmatpush1.msra.mxu0 0.0
        %1209 = vmatprep.subr.mxu0 0.0
        %1210 = vmatpush1.msra.mxu0 0.0
        %1211 = vmatprep.subr.mxu0 0.0
        %1212 = vmatpush1.msra.mxu0 0.0
        %1213 = vmatprep.subr.mxu0 0.0
        %1214 = vmatpush1.msra.mxu0 0.0
        %1215 = vmatprep.subr.mxu0 0.0
        %1216 = vmatpush1.msra.mxu0 0.0
        %1217 = vmatprep.subr.mxu0 0.0
        %1218 = vmatpush1.msra.mxu0 0.0
        %1219 = vmatprep.subr.mxu0 0.0
        %1220 = vmatpush1.msra.mxu0 0.0
        %1221 = vmatprep.subr.mxu0 0.0
        %1222 = vmatpush1.msra.mxu0 0.0
        %1223 = vmatprep.subr.mxu0 0.0
        %1224 = vmatpush1.msra.mxu0 0.0
        %1225 = vmatprep.subr.mxu0 0.0
        %1226 = vmatpush1.msra.mxu0 0.0
        %1227 = vmatprep.subr.mxu0 0.0
        %1228 = vmatpush1.msra.mxu0 0.0
        %1229 = vmatprep.subr.mxu0 0.0
        %1230 = vmatpush1.msra.mxu0 0.0
        %1231 = vmatprep.subr.mxu0 0.0
        %1232 = vmatpush1.msra.mxu0 0.0
        %1233 = vmatprep.subr.mxu0 0.0
        %1234 = vmatpush1.msra.mxu0 0.0
        %1235 = vmatprep.subr.mxu0 0.0
        %1236 = vmatpush1.msra.mxu0 0.0
        %1237 = vmatprep.subr.mxu0 0.0
        %1238 = vmatpush1.msra.mxu0 0.0
        %1239 = vmatprep.subr.mxu0 0.0
        %1240 = vmatpush1.msra.mxu0 0.0
        %1241 = vmatprep.subr.mxu0 0.0
        %1242 = vmatpush1.msra.mxu0 0.0
        %1243 = vmatprep.subr.mxu0 0.0
        %1244 = vmatpush1.msra.mxu0 0.0
        %1245 = vmatprep.subr.mxu0 0.0
        %1246 = vmatpush1.msra.mxu0 0.0
        %1247 = vmatprep.subr.mxu0 0.0
        %1248 = vmatpush1.msra.mxu0 0.0
        %1249 = vmatprep.subr.mxu0 0.0
        %1250 = vmatpush1.msra.mxu0 0.0
        %1251 = vmatprep.subr.mxu0 0.0
        %1252 = vmatpush1.msra.mxu0 0.0
        %1253 = vmatprep.subr.mxu0 0.0
        %1254 = vmatpush1.msra.mxu0 0.0
        %1255 = vmatprep.subr.mxu0 0.0
        %1256 = vmatpush1.msra.mxu0 0.0
        %1257 = vmatprep.subr.mxu0 0.0
        %1258 = vmatpush1.msra.mxu0 0.0
        %1259 = vmatprep.subr.mxu0 0.0
        %1260 = vmatpush1.msra.mxu0 0.0
        %1261 = vmatprep.subr.mxu0 0.0
        %1262 = vmatpush1.msra.mxu0 0.0
        %1263 = vmatprep.subr.mxu0 0.0
        %1264 = vmatpush1.msra.mxu0 0.0
        %1265 = vmatprep.subr.mxu0 0.0
        %1266 = vmatpush1.msra.mxu0 0.0
        %1267 = vmatprep.mubr.f32.mxu0 0.0
        %1268 = vmatmul.mubr.f32.gmra.mrb[0].mxu0 %v1201
        %v1269 = vpop.f32.mrb[0].mxu0
        %v1270 = vadd.f32 0.0, %v1269
        %v1271 = vpop.f32.mrb[0].mxu0
        %1272 = vdwg.mxu0
        %v1273 = vadd.f32 %v1043, %v1270
        %v1274 = vld [vmem:[%s4] sm:$0x1]
        %v1276 = vlaneseq
        %v1277 = vshrl.u32 %v1276, 7
        %v1278 = vsub.s32 0, %v1277
        %v1279 = vrot.slane %v1274, %v1278
        %v1281 = vadd.f32 %v1273, %v1279
        %1282 = vst.msk [vmem:[%s268] sm:$0xff] %vm281, %v1281
        %s1283 = sand.u32 %s141, 1
        %s1284 = scalar_lea.sflag [#allocation4], %s1283
        %s1285 = sand.u32 %s141, 1
        %s1286 = smul.addr %s1285, 8
        %s1287 = scalar_lea.vmem [#allocation8], %s1286
        // Predicated region
        $region53: #{tpu_custom_call.1} parent=39 // pred_check
          %p1288 = pneg %p151
        $region54: #{tpu_custom_call.1} parent=39 // pred_check_branch
          %1290 = sbr.rel (%p1288) target = $region56
        $region55: #{tpu_custom_call.1} parent=39 // pred_region
          %s1292 = ssub.s32 128, 128
          %1293 = vsyncadd %s1284, %s1292
          %s1294 = smul.addr %s23, 128
          %s1295 = scalar_lea.hbm %s5, %s1294
          %s1297 = sshll.u32 %s1287, 4
          %s1298 = int_to_ptr.vmem [resolvable:$true] %s1297
          %1300 = dma.vmem_to_hbm [thread:$0]  %s1298, 128, %s1295, %s1284
        $region56: #{tpu_custom_call.1} parent=39 // pred_fallthru
          _
      $region40: #{tpu_custom_call.1} parent=5 // pred_fallthru
        _
      %p1301 = scmp.le.s32.totalorder 2, %s18
      // Predicated region
      $region57: #{tpu_custom_call.1} parent=5 // pred_check
        %p1302 = pneg %p1301
      $region58: #{tpu_custom_call.1} parent=5 // pred_check_branch
        %1304 = sbr.rel (%p1302) target = $region60
      $region59: #{tpu_custom_call.1} parent=5 // pred_region
        %s1305 = ssub.s32 %s18, 2
        // Predicated region
        $region61: #{tpu_custom_call.1} parent=59 // pred_check
          %p1306 = pneg %p157
        $region62: #{tpu_custom_call.1} parent=59 // pred_check_branch
          %1308 = sbr.rel (%p1306) target = $region64
        $region63: #{tpu_custom_call.1} parent=59 // pred_region
          %s1309 = sand.u32 %s142, 1
          %s1310 = scalar_lea.sflag [#allocation4], %s1309
          %s1311 = sand.u32 %s142, 1
          %s1312 = smul.addr %s1311, 8
          %s1313 = scalar_lea.vmem [#allocation8], %s1312
          %1314 = dma.done %s1310, 128
        $region64: #{tpu_custom_call.1} parent=59 // pred_fallthru
          _
      $region60: #{tpu_custom_call.1} parent=5 // pred_fallthru
        _
    $region6: #{tpu_custom_call.1} parent=1 // loop_footer
      %s22 = sadd.s32 1, %s18
    $region7: #{tpu_custom_call.1} parent=1 // loop_footer_branch
      %17 = sbr.rel target = $region3
    $region8: #{tpu_custom_call.1} parent=1 // loop_exit
      _
    %1315 = vsyncpa [#allocation3], 1
    %s1316 = scalar_lea.sflag [#allocation3], 1
    %1317 = vsyncpa %s1316, 1
    %1318 = vsyncpa [#allocation6], 1
    %1319 = vsyncpa [#allocation4], 1
    %s1320 = scalar_lea.sflag [#allocation4], 1
    %1321 = vsyncpa %s1320, 1

</llo_original>
